<compile_context>
chip_gen: v7x
topology: tpu7x:2x2x1
jax: 0.10.0
libtpu: 0.0.40
codegen_flags: <defaults>
</compile_context>

<pallas_src>
import functools

import jax
import jax.numpy as jnp
from jax.experimental import pallas as pl
from jax.experimental.pallas import tpu as pltpu


def _leaky_relu(x, slope=0.05):
    return jnp.where(x >= 0, x, slope * x)


def fblock_kernel(x_ref, masks_ref, w1_ref, b1_ref, w2_ref, b2_ref, o_ref, *, H, W):
    # x_ref    : (1, C_in, H*W)      bf16   flattened NCHW image block
    # masks_ref: (9, H*W)            f32    0/1 validity mask per tap (shared by both convs)
    # w1_ref   : (9, C_mid, C_in)    bf16   tap-major packed conv1 weights
    # b1_ref   : (C_mid, 1)          f32
    # w2_ref   : (9, C_mid, C_mid)   bf16   tap-major packed conv2 weights
    # b2_ref   : (C_mid, 1)          f32
    # o_ref    : (1, C_mid, H*W)     f32    lane-dense output block (pixels on lanes)
    HW = H * W

    def conv3x3(src, w_ref):
        # src: (C_in, HW) f32 ; w_ref: (9, C_out, C_in) bf16. Returns (C_out, HW) f32.
        c_out = w_ref.shape[1]
        acc = jnp.zeros((c_out, HW), jnp.float32)
        t = 0
        for dh in (-1, 0, 1):
            for dw in (-1, 0, 1):
                off = dh * W + dw
                if off == 0:
                    tap = src                                  # center tap: no shift, always valid
                else:
                    # Lane-axis rotate (XLU slot) + 0/1 edge mask instead of halo-padded slices.
                    shifted = pltpu.roll(src, shift=(-off) % HW, axis=1)
                    tap = shifted * masks_ref[t:t + 1, :]
                acc = acc + jnp.dot(w_ref[t], tap.astype(jnp.bfloat16),
                                    preferred_element_type=jnp.float32)
                t += 1
        return acc

    x32 = x_ref[0].astype(jnp.float32)                          # (C_in, HW)
    h1 = _leaky_relu(conv3x3(x32, w1_ref) + b1_ref[...])        # (C_mid, HW) f32
    h2 = _leaky_relu(conv3x3(h1, w2_ref) + b2_ref[...])         # (C_mid, HW) f32
    o_ref[0] = h2.astype(o_ref.dtype)


def fblock_forward(x_nchw, w1_oihw, b1, w2_oihw, b2):
    """Pallas implementation of FBlock.forward. Input/output are NCHW like PyTorch."""
    N, C_in, H, W = x_nchw.shape
    C_mid = w1_oihw.shape[0]
    HW = H * W

    # Free reshape: NCHW -> (N, C_in, H*W).  Pixels land on the lane axis; bf16 halves
    # HBM traffic and VMEM footprint for all DMA'd operands.
    x_flat = x_nchw.reshape(N, C_in, HW).astype(jnp.bfloat16)

    # Tap-major packed weights: [t = kh*3 + kw, out_ch, in_ch], matching the kernel's
    # (dh, dw) loop order.  Biases as (C, 1) so they broadcast over the lane (pixel) axis.
    w1_p = jnp.transpose(w1_oihw, (2, 3, 0, 1)).reshape(9, C_mid, C_in).astype(jnp.bfloat16)
    w2_p = jnp.transpose(w2_oihw, (2, 3, 0, 1)).reshape(9, C_mid, C_mid).astype(jnp.bfloat16)
    b1_c = b1.reshape(C_mid, 1).astype(jnp.float32)
    b2_c = b2.reshape(C_mid, 1).astype(jnp.float32)

    # Per-tap validity masks over the flattened pixel index (same for every image and
    # for both convs): 1.0 where the shifted neighbour exists, 0.0 at the zero-pad border.
    hh = jnp.arange(H).reshape(H, 1)
    ww = jnp.arange(W).reshape(1, W)
    mask_rows = []
    for dh in (-1, 0, 1):
        for dw in (-1, 0, 1):
            valid = (hh + dh >= 0) & (hh + dh < H) & (ww + dw >= 0) & (ww + dw < W)
            mask_rows.append(valid.reshape(HW))
    masks = jnp.stack(mask_rows, axis=0).astype(jnp.float32)        # (9, HW)

    kernel = functools.partial(fblock_kernel, H=H, W=W)

    # TODO(synk): for very large H*W, add a spatial (row-tile) grid axis with a 1-row halo
    # so per-step VMEM stays bounded; not needed at these test shapes.
    out = pl.pallas_call(
        kernel,
        out_shape=jax.ShapeDtypeStruct((N, C_mid, HW), jnp.float32),
        grid_spec=pltpu.PrefetchScalarGridSpec(
            num_scalar_prefetch=0,
            grid=(N,),
            in_specs=[
                pl.BlockSpec((1, C_in, HW), lambda n: (n, 0, 0)),       # per-image input
                pl.BlockSpec((9, HW), lambda n: (0, 0)),                # masks (resident)
                pl.BlockSpec((9, C_mid, C_in), lambda n: (0, 0, 0)),    # w1 (resident)
                pl.BlockSpec((C_mid, 1), lambda n: (0, 0)),             # b1 (resident)
                pl.BlockSpec((9, C_mid, C_mid), lambda n: (0, 0, 0)),   # w2 (resident)
                pl.BlockSpec((C_mid, 1), lambda n: (0, 0)),             # b2 (resident)
            ],
            out_specs=pl.BlockSpec((1, C_mid, HW), lambda n: (n, 0, 0)),
        ),
        compiler_params=pltpu.CompilerParams(
            dimension_semantics=("parallel",),
            vmem_limit_bytes=48 * 1024 * 1024,   # safe ceiling on v5e/v6e/v7x
        ),
    )(x_flat, masks, w1_p, b1_c, w2_p, b2_c)

    # Output is already channel-major; reshaping (N, C, H*W) -> NCHW is free.
    return out.reshape(N, C_mid, H, W)


def fblock_reference(x_nchw, w1_oihw, b1, w2_oihw, b2):
    """Pure-JAX reference mirroring the PyTorch module (full f32 precision)."""
    def conv(x, w, b):
        y = jax.lax.conv_general_dilated(
            x, w, window_strides=(1, 1), padding=((1, 1), (1, 1)),
            dimension_numbers=("NCHW", "OIHW", "NCHW"),
            precision=jax.lax.Precision.HIGHEST,
        )
        return y + b[None, :, None, None]

    h = _leaky_relu(conv(x_nchw, w1_oihw, b1))
    return _leaky_relu(conv(h, w2_oihw, b2))


if __name__ == "__main__":
    # Small deterministic setup consistent with FBlock(num_features=32), 3 input channels.
    N, C_in, H, W = 2, 3, 16, 16
    num_features = 32

    key = jax.random.PRNGKey(0)
    kx, kw1, kb1, kw2, kb2 = jax.random.split(key, 5)

    x = jax.random.normal(kx, (N, C_in, H, W), dtype=jnp.float32)
    w1 = 0.1 * jax.random.normal(kw1, (num_features, C_in, 3, 3), dtype=jnp.float32)
    b1 = 0.1 * jax.random.normal(kb1, (num_features,), dtype=jnp.float32)
    w2 = 0.1 * jax.random.normal(kw2, (num_features, num_features, 3, 3), dtype=jnp.float32)
    b2 = 0.1 * jax.random.normal(kb2, (num_features,), dtype=jnp.float32)

    out = jax.block_until_ready(jax.jit(fblock_forward)(x, w1, b1, w2, b2))
    ref = jax.block_until_ready(fblock_reference(x, w1, b1, w2, b2))

    assert out.shape == (N, num_features, H, W), out.shape
    max_err = float(jnp.max(jnp.abs(out - ref)))
    # Tolerance relaxed vs the f32-HIGHEST reference: kernel operands are fed to the MXU
    # as bf16 (native single-pass) per the performance review; accumulation is f32.
    assert jnp.allclose(out, ref, atol=3e-2, rtol=3e-2), f"max_err={max_err}"

    print("KERNEL_OK")
</pallas_src>

<mosaic_0001>
module attributes {stable_mosaic.version = 11 : i64} {
  func.func @fblock_kernel(%arg0: i32, %arg1: memref<1x3x256xbf16, #tpu.memory_space<vmem>>, %arg2: memref<9x256xf32, #tpu.memory_space<vmem>>, %arg3: memref<9x32x3xbf16, #tpu.memory_space<vmem>>, %arg4: memref<32x1xf32, #tpu.memory_space<vmem>>, %arg5: memref<9x32x32xbf16, #tpu.memory_space<vmem>>, %arg6: memref<32x1xf32, #tpu.memory_space<vmem>>, %arg7: memref<1x32x256xf32, #tpu.memory_space<vmem>>) attributes {dimension_semantics = [#tpu.dimension_semantics<parallel>], iteration_bounds = array<i64: 2>, scalar_prefetch = 0 : i64, scratch_operands = 0 : i64, tpu.core_type = #tpu.core_type<tc>, window_params = [{transform_indices = @transform_0, window_bounds = array<i64: 1, 3, 256>}, {pipeline_mode = #tpu.pipeline_mode<synchronous>, transform_indices = @transform_1, window_bounds = array<i64: 9, 256>}, {pipeline_mode = #tpu.pipeline_mode<synchronous>, transform_indices = @transform_2, window_bounds = array<i64: 9, 32, 3>}, {pipeline_mode = #tpu.pipeline_mode<synchronous>, transform_indices = @transform_3, window_bounds = array<i64: 32, 1>}, {pipeline_mode = #tpu.pipeline_mode<synchronous>, transform_indices = @transform_4, window_bounds = array<i64: 9, 32, 32>}, {pipeline_mode = #tpu.pipeline_mode<synchronous>, transform_indices = @transform_5, window_bounds = array<i64: 32, 1>}, {transform_indices = @transform_6, window_bounds = array<i64: 1, 32, 256>}]} {
    %c0 = arith.constant 0 : index
    %c0_0 = arith.constant 0 : index
    %c0_1 = arith.constant 0 : index
    %0 = vector.load %arg1[%c0, %c0_0, %c0_1] : memref<1x3x256xbf16, #tpu.memory_space<vmem>>, vector<1x3x256xbf16>
    %1 = vector.shape_cast %0 : vector<1x3x256xbf16> to vector<3x256xbf16>
    %2 = arith.extf %1 : vector<3x256xbf16> to vector<3x256xf32>
    %cst = arith.constant 0.000000e+00 : f32
    %3 = vector.broadcast %cst : f32 to vector<32x256xf32>
    %c17_i32 = arith.constant 17 : i32
    %4 = tpu.dynamic_rotate %2 by %c17_i32 dim 1 : vector<3x256xf32>, i32 -> vector<3x256xf32>
    %c0_2 = arith.constant 0 : index
    %c0_3 = arith.constant 0 : index
    %5 = vector.load %arg2[%c0_2, %c0_3] : memref<9x256xf32, #tpu.memory_space<vmem>>, vector<1x256xf32>
    %6 = vector.broadcast %5 : vector<1x256xf32> to vector<3x256xf32>
    %7 = arith.mulf %4, %6 : vector<3x256xf32>
    %c0_4 = arith.constant 0 : index
    %c0_5 = arith.constant 0 : index
    %c0_6 = arith.constant 0 : index
    %8 = vector.load %arg3[%c0_4, %c0_5, %c0_6] : memref<9x32x3xbf16, #tpu.memory_space<vmem>>, vector<1x32x3xbf16>
    %9 = vector.shape_cast %8 : vector<1x32x3xbf16> to vector<32x3xbf16>
    %10 = arith.truncf %7 : vector<3x256xf32> to vector<3x256xbf16>
    %cst_7 = arith.constant dense<0.000000e+00> : vector<32x256xf32>
    %11 = tpu.matmul %9, %10, %cst_7 {dimension_numbers = #tpu.dot_dimension_numbers<[1], [0], [0], [1], [0, 0, 1, 1], [], []>} : vector<32x3xbf16>, vector<3x256xbf16>, vector<32x256xf32> -> vector<32x256xf32>
    %12 = arith.addf %3, %11 : vector<32x256xf32>
    %c16_i32 = arith.constant 16 : i32
    %13 = tpu.dynamic_rotate %2 by %c16_i32 dim 1 : vector<3x256xf32>, i32 -> vector<3x256xf32>
    %c1 = arith.constant 1 : index
    %c0_8 = arith.constant 0 : index
    %14 = vector.load %arg2[%c1, %c0_8] : memref<9x256xf32, #tpu.memory_space<vmem>>, vector<1x256xf32>
    %15 = vector.broadcast %14 : vector<1x256xf32> to vector<3x256xf32>
    %16 = arith.mulf %13, %15 : vector<3x256xf32>
    %c1_9 = arith.constant 1 : index
    %c0_10 = arith.constant 0 : index
    %c0_11 = arith.constant 0 : index
    %17 = vector.load %arg3[%c1_9, %c0_10, %c0_11] : memref<9x32x3xbf16, #tpu.memory_space<vmem>>, vector<1x32x3xbf16>
    %18 = vector.shape_cast %17 : vector<1x32x3xbf16> to vector<32x3xbf16>
    %19 = arith.truncf %16 : vector<3x256xf32> to vector<3x256xbf16>
    %cst_12 = arith.constant dense<0.000000e+00> : vector<32x256xf32>
    %20 = tpu.matmul %18, %19, %cst_12 {dimension_numbers = #tpu.dot_dimension_numbers<[1], [0], [0], [1], [0, 0, 1, 1], [], []>} : vector<32x3xbf16>, vector<3x256xbf16>, vector<32x256xf32> -> vector<32x256xf32>
    %21 = arith.addf %12, %20 : vector<32x256xf32>
    %c15_i32 = arith.constant 15 : i32
    %22 = tpu.dynamic_rotate %2 by %c15_i32 dim 1 : vector<3x256xf32>, i32 -> vector<3x256xf32>
    %c2 = arith.constant 2 : index
    %c0_13 = arith.constant 0 : index
    %23 = vector.load %arg2[%c2, %c0_13] : memref<9x256xf32, #tpu.memory_space<vmem>>, vector<1x256xf32>
    %24 = vector.broadcast %23 : vector<1x256xf32> to vector<3x256xf32>
    %25 = arith.mulf %22, %24 : vector<3x256xf32>
    %c2_14 = arith.constant 2 : index
    %c0_15 = arith.constant 0 : index
    %c0_16 = arith.constant 0 : index
    %26 = vector.load %arg3[%c2_14, %c0_15, %c0_16] : memref<9x32x3xbf16, #tpu.memory_space<vmem>>, vector<1x32x3xbf16>
    %27 = vector.shape_cast %26 : vector<1x32x3xbf16> to vector<32x3xbf16>
    %28 = arith.truncf %25 : vector<3x256xf32> to vector<3x256xbf16>
    %cst_17 = arith.constant dense<0.000000e+00> : vector<32x256xf32>
    %29 = tpu.matmul %27, %28, %cst_17 {dimension_numbers = #tpu.dot_dimension_numbers<[1], [0], [0], [1], [0, 0, 1, 1], [], []>} : vector<32x3xbf16>, vector<3x256xbf16>, vector<32x256xf32> -> vector<32x256xf32>
    %30 = arith.addf %21, %29 : vector<32x256xf32>
    %c1_i32 = arith.constant 1 : i32
    %31 = tpu.dynamic_rotate %2 by %c1_i32 dim 1 : vector<3x256xf32>, i32 -> vector<3x256xf32>
    %c3 = arith.constant 3 : index
    %c0_18 = arith.constant 0 : index
    %32 = vector.load %arg2[%c3, %c0_18] : memref<9x256xf32, #tpu.memory_space<vmem>>, vector<1x256xf32>
    %33 = vector.broadcast %32 : vector<1x256xf32> to vector<3x256xf32>
    %34 = arith.mulf %31, %33 : vector<3x256xf32>
    %c3_19 = arith.constant 3 : index
    %c0_20 = arith.constant 0 : index
    %c0_21 = arith.constant 0 : index
    %35 = vector.load %arg3[%c3_19, %c0_20, %c0_21] : memref<9x32x3xbf16, #tpu.memory_space<vmem>>, vector<1x32x3xbf16>
    %36 = vector.shape_cast %35 : vector<1x32x3xbf16> to vector<32x3xbf16>
    %37 = arith.truncf %34 : vector<3x256xf32> to vector<3x256xbf16>
    %cst_22 = arith.constant dense<0.000000e+00> : vector<32x256xf32>
    %38 = tpu.matmul %36, %37, %cst_22 {dimension_numbers = #tpu.dot_dimension_numbers<[1], [0], [0], [1], [0, 0, 1, 1], [], []>} : vector<32x3xbf16>, vector<3x256xbf16>, vector<32x256xf32> -> vector<32x256xf32>
    %39 = arith.addf %30, %38 : vector<32x256xf32>
    %c4 = arith.constant 4 : index
    %c0_23 = arith.constant 0 : index
    %c0_24 = arith.constant 0 : index
    %40 = vector.load %arg3[%c4, %c0_23, %c0_24] : memref<9x32x3xbf16, #tpu.memory_space<vmem>>, vector<1x32x3xbf16>
    %41 = vector.shape_cast %40 : vector<1x32x3xbf16> to vector<32x3xbf16>
    %42 = arith.truncf %2 : vector<3x256xf32> to vector<3x256xbf16>
    %cst_25 = arith.constant dense<0.000000e+00> : vector<32x256xf32>
    %43 = tpu.matmul %41, %42, %cst_25 {dimension_numbers = #tpu.dot_dimension_numbers<[1], [0], [0], [1], [0, 0, 1, 1], [], []>} : vector<32x3xbf16>, vector<3x256xbf16>, vector<32x256xf32> -> vector<32x256xf32>
    %44 = arith.addf %39, %43 : vector<32x256xf32>
    %c255_i32 = arith.constant 255 : i32
    %45 = tpu.dynamic_rotate %2 by %c255_i32 dim 1 : vector<3x256xf32>, i32 -> vector<3x256xf32>
    %c5 = arith.constant 5 : index
    %c0_26 = arith.constant 0 : index
    %46 = vector.load %arg2[%c5, %c0_26] : memref<9x256xf32, #tpu.memory_space<vmem>>, vector<1x256xf32>
    %47 = vector.broadcast %46 : vector<1x256xf32> to vector<3x256xf32>
    %48 = arith.mulf %45, %47 : vector<3x256xf32>
    %c5_27 = arith.constant 5 : index
    %c0_28 = arith.constant 0 : index
    %c0_29 = arith.constant 0 : index
    %49 = vector.load %arg3[%c5_27, %c0_28, %c0_29] : memref<9x32x3xbf16, #tpu.memory_space<vmem>>, vector<1x32x3xbf16>
    %50 = vector.shape_cast %49 : vector<1x32x3xbf16> to vector<32x3xbf16>
    %51 = arith.truncf %48 : vector<3x256xf32> to vector<3x256xbf16>
    %cst_30 = arith.constant dense<0.000000e+00> : vector<32x256xf32>
    %52 = tpu.matmul %50, %51, %cst_30 {dimension_numbers = #tpu.dot_dimension_numbers<[1], [0], [0], [1], [0, 0, 1, 1], [], []>} : vector<32x3xbf16>, vector<3x256xbf16>, vector<32x256xf32> -> vector<32x256xf32>
    %53 = arith.addf %44, %52 : vector<32x256xf32>
    %c241_i32 = arith.constant 241 : i32
    %54 = tpu.dynamic_rotate %2 by %c241_i32 dim 1 : vector<3x256xf32>, i32 -> vector<3x256xf32>
    %c6 = arith.constant 6 : index
    %c0_31 = arith.constant 0 : index
    %55 = vector.load %arg2[%c6, %c0_31] : memref<9x256xf32, #tpu.memory_space<vmem>>, vector<1x256xf32>
    %56 = vector.broadcast %55 : vector<1x256xf32> to vector<3x256xf32>
    %57 = arith.mulf %54, %56 : vector<3x256xf32>
    %c6_32 = arith.constant 6 : index
    %c0_33 = arith.constant 0 : index
    %c0_34 = arith.constant 0 : index
    %58 = vector.load %arg3[%c6_32, %c0_33, %c0_34] : memref<9x32x3xbf16, #tpu.memory_space<vmem>>, vector<1x32x3xbf16>
    %59 = vector.shape_cast %58 : vector<1x32x3xbf16> to vector<32x3xbf16>
    %60 = arith.truncf %57 : vector<3x256xf32> to vector<3x256xbf16>
    %cst_35 = arith.constant dense<0.000000e+00> : vector<32x256xf32>
    %61 = tpu.matmul %59, %60, %cst_35 {dimension_numbers = #tpu.dot_dimension_numbers<[1], [0], [0], [1], [0, 0, 1, 1], [], []>} : vector<32x3xbf16>, vector<3x256xbf16>, vector<32x256xf32> -> vector<32x256xf32>
    %62 = arith.addf %53, %61 : vector<32x256xf32>
    %c240_i32 = arith.constant 240 : i32
    %63 = tpu.dynamic_rotate %2 by %c240_i32 dim 1 : vector<3x256xf32>, i32 -> vector<3x256xf32>
    %c7 = arith.constant 7 : index
    %c0_36 = arith.constant 0 : index
    %64 = vector.load %arg2[%c7, %c0_36] : memref<9x256xf32, #tpu.memory_space<vmem>>, vector<1x256xf32>
    %65 = vector.broadcast %64 : vector<1x256xf32> to vector<3x256xf32>
    %66 = arith.mulf %63, %65 : vector<3x256xf32>
    %c7_37 = arith.constant 7 : index
    %c0_38 = arith.constant 0 : index
    %c0_39 = arith.constant 0 : index
    %67 = vector.load %arg3[%c7_37, %c0_38, %c0_39] : memref<9x32x3xbf16, #tpu.memory_space<vmem>>, vector<1x32x3xbf16>
    %68 = vector.shape_cast %67 : vector<1x32x3xbf16> to vector<32x3xbf16>
    %69 = arith.truncf %66 : vector<3x256xf32> to vector<3x256xbf16>
    %cst_40 = arith.constant dense<0.000000e+00> : vector<32x256xf32>
    %70 = tpu.matmul %68, %69, %cst_40 {dimension_numbers = #tpu.dot_dimension_numbers<[1], [0], [0], [1], [0, 0, 1, 1], [], []>} : vector<32x3xbf16>, vector<3x256xbf16>, vector<32x256xf32> -> vector<32x256xf32>
    %71 = arith.addf %62, %70 : vector<32x256xf32>
    %c239_i32 = arith.constant 239 : i32
    %72 = tpu.dynamic_rotate %2 by %c239_i32 dim 1 : vector<3x256xf32>, i32 -> vector<3x256xf32>
    %c8 = arith.constant 8 : index
    %c0_41 = arith.constant 0 : index
    %73 = vector.load %arg2[%c8, %c0_41] : memref<9x256xf32, #tpu.memory_space<vmem>>, vector<1x256xf32>
    %74 = vector.broadcast %73 : vector<1x256xf32> to vector<3x256xf32>
    %75 = arith.mulf %72, %74 : vector<3x256xf32>
    %c8_42 = arith.constant 8 : index
    %c0_43 = arith.constant 0 : index
    %c0_44 = arith.constant 0 : index
    %76 = vector.load %arg3[%c8_42, %c0_43, %c0_44] : memref<9x32x3xbf16, #tpu.memory_space<vmem>>, vector<1x32x3xbf16>
    %77 = vector.shape_cast %76 : vector<1x32x3xbf16> to vector<32x3xbf16>
    %78 = arith.truncf %75 : vector<3x256xf32> to vector<3x256xbf16>
    %cst_45 = arith.constant dense<0.000000e+00> : vector<32x256xf32>
    %79 = tpu.matmul %77, %78, %cst_45 {dimension_numbers = #tpu.dot_dimension_numbers<[1], [0], [0], [1], [0, 0, 1, 1], [], []>} : vector<32x3xbf16>, vector<3x256xbf16>, vector<32x256xf32> -> vector<32x256xf32>
    %80 = arith.addf %71, %79 : vector<32x256xf32>
    %c0_46 = arith.constant 0 : index
    %c0_47 = arith.constant 0 : index
    %81 = vector.load %arg4[%c0_46, %c0_47] : memref<32x1xf32, #tpu.memory_space<vmem>>, vector<32x1xf32>
    %82 = vector.broadcast %81 : vector<32x1xf32> to vector<32x256xf32>
    %83 = arith.addf %80, %82 : vector<32x256xf32>
    %cst_48 = arith.constant 0.000000e+00 : f32
    %84 = vector.broadcast %cst_48 : f32 to vector<32x256xf32>
    %85 = arith.cmpf oge, %83, %84 : vector<32x256xf32>
    %cst_49 = arith.constant 5.000000e-02 : f32
    %86 = vector.broadcast %cst_49 : f32 to vector<32x256xf32>
    %87 = arith.mulf %86, %83 : vector<32x256xf32>
    %88 = arith.select %85, %83, %87 : vector<32x256xi1>, vector<32x256xf32>
    %cst_50 = arith.constant 0.000000e+00 : f32
    %89 = vector.broadcast %cst_50 : f32 to vector<32x256xf32>
    %c17_i32_51 = arith.constant 17 : i32
    %90 = tpu.dynamic_rotate %88 by %c17_i32_51 dim 1 : vector<32x256xf32>, i32 -> vector<32x256xf32>
    %c0_52 = arith.constant 0 : index
    %c0_53 = arith.constant 0 : index
    %91 = vector.load %arg2[%c0_52, %c0_53] : memref<9x256xf32, #tpu.memory_space<vmem>>, vector<1x256xf32>
    %92 = vector.broadcast %91 : vector<1x256xf32> to vector<32x256xf32>
    %93 = arith.mulf %90, %92 : vector<32x256xf32>
    %c0_54 = arith.constant 0 : index
    %c0_55 = arith.constant 0 : index
    %c0_56 = arith.constant 0 : index
    %94 = vector.load %arg5[%c0_54, %c0_55, %c0_56] : memref<9x32x32xbf16, #tpu.memory_space<vmem>>, vector<1x32x32xbf16>
    %95 = vector.shape_cast %94 : vector<1x32x32xbf16> to vector<32x32xbf16>
    %96 = arith.truncf %93 : vector<32x256xf32> to vector<32x256xbf16>
    %cst_57 = arith.constant dense<0.000000e+00> : vector<32x256xf32>
    %97 = tpu.matmul %95, %96, %cst_57 {dimension_numbers = #tpu.dot_dimension_numbers<[1], [0], [0], [1], [0, 0, 1, 1], [], []>} : vector<32x32xbf16>, vector<32x256xbf16>, vector<32x256xf32> -> vector<32x256xf32>
    %98 = arith.addf %89, %97 : vector<32x256xf32>
    %c16_i32_58 = arith.constant 16 : i32
    %99 = tpu.dynamic_rotate %88 by %c16_i32_58 dim 1 : vector<32x256xf32>, i32 -> vector<32x256xf32>
    %c1_59 = arith.constant 1 : index
    %c0_60 = arith.constant 0 : index
    %100 = vector.load %arg2[%c1_59, %c0_60] : memref<9x256xf32, #tpu.memory_space<vmem>>, vector<1x256xf32>
    %101 = vector.broadcast %100 : vector<1x256xf32> to vector<32x256xf32>
    %102 = arith.mulf %99, %101 : vector<32x256xf32>
    %c1_61 = arith.constant 1 : index
    %c0_62 = arith.constant 0 : index
    %c0_63 = arith.constant 0 : index
    %103 = vector.load %arg5[%c1_61, %c0_62, %c0_63] : memref<9x32x32xbf16, #tpu.memory_space<vmem>>, vector<1x32x32xbf16>
    %104 = vector.shape_cast %103 : vector<1x32x32xbf16> to vector<32x32xbf16>
    %105 = arith.truncf %102 : vector<32x256xf32> to vector<32x256xbf16>
    %cst_64 = arith.constant dense<0.000000e+00> : vector<32x256xf32>
    %106 = tpu.matmul %104, %105, %cst_64 {dimension_numbers = #tpu.dot_dimension_numbers<[1], [0], [0], [1], [0, 0, 1, 1], [], []>} : vector<32x32xbf16>, vector<32x256xbf16>, vector<32x256xf32> -> vector<32x256xf32>
    %107 = arith.addf %98, %106 : vector<32x256xf32>
    %c15_i32_65 = arith.constant 15 : i32
    %108 = tpu.dynamic_rotate %88 by %c15_i32_65 dim 1 : vector<32x256xf32>, i32 -> vector<32x256xf32>
    %c2_66 = arith.constant 2 : index
    %c0_67 = arith.constant 0 : index
    %109 = vector.load %arg2[%c2_66, %c0_67] : memref<9x256xf32, #tpu.memory_space<vmem>>, vector<1x256xf32>
    %110 = vector.broadcast %109 : vector<1x256xf32> to vector<32x256xf32>
    %111 = arith.mulf %108, %110 : vector<32x256xf32>
    %c2_68 = arith.constant 2 : index
    %c0_69 = arith.constant 0 : index
    %c0_70 = arith.constant 0 : index
    %112 = vector.load %arg5[%c2_68, %c0_69, %c0_70] : memref<9x32x32xbf16, #tpu.memory_space<vmem>>, vector<1x32x32xbf16>
    %113 = vector.shape_cast %112 : vector<1x32x32xbf16> to vector<32x32xbf16>
    %114 = arith.truncf %111 : vector<32x256xf32> to vector<32x256xbf16>
    %cst_71 = arith.constant dense<0.000000e+00> : vector<32x256xf32>
    %115 = tpu.matmul %113, %114, %cst_71 {dimension_numbers = #tpu.dot_dimension_numbers<[1], [0], [0], [1], [0, 0, 1, 1], [], []>} : vector<32x32xbf16>, vector<32x256xbf16>, vector<32x256xf32> -> vector<32x256xf32>
    %116 = arith.addf %107, %115 : vector<32x256xf32>
    %c1_i32_72 = arith.constant 1 : i32
    %117 = tpu.dynamic_rotate %88 by %c1_i32_72 dim 1 : vector<32x256xf32>, i32 -> vector<32x256xf32>
    %c3_73 = arith.constant 3 : index
    %c0_74 = arith.constant 0 : index
    %118 = vector.load %arg2[%c3_73, %c0_74] : memref<9x256xf32, #tpu.memory_space<vmem>>, vector<1x256xf32>
    %119 = vector.broadcast %118 : vector<1x256xf32> to vector<32x256xf32>
    %120 = arith.mulf %117, %119 : vector<32x256xf32>
    %c3_75 = arith.constant 3 : index
    %c0_76 = arith.constant 0 : index
    %c0_77 = arith.constant 0 : index
    %121 = vector.load %arg5[%c3_75, %c0_76, %c0_77] : memref<9x32x32xbf16, #tpu.memory_space<vmem>>, vector<1x32x32xbf16>
    %122 = vector.shape_cast %121 : vector<1x32x32xbf16> to vector<32x32xbf16>
    %123 = arith.truncf %120 : vector<32x256xf32> to vector<32x256xbf16>
    %cst_78 = arith.constant dense<0.000000e+00> : vector<32x256xf32>
    %124 = tpu.matmul %122, %123, %cst_78 {dimension_numbers = #tpu.dot_dimension_numbers<[1], [0], [0], [1], [0, 0, 1, 1], [], []>} : vector<32x32xbf16>, vector<32x256xbf16>, vector<32x256xf32> -> vector<32x256xf32>
    %125 = arith.addf %116, %124 : vector<32x256xf32>
    %c4_79 = arith.constant 4 : index
    %c0_80 = arith.constant 0 : index
    %c0_81 = arith.constant 0 : index
    %126 = vector.load %arg5[%c4_79, %c0_80, %c0_81] : memref<9x32x32xbf16, #tpu.memory_space<vmem>>, vector<1x32x32xbf16>
    %127 = vector.shape_cast %126 : vector<1x32x32xbf16> to vector<32x32xbf16>
    %128 = arith.truncf %88 : vector<32x256xf32> to vector<32x256xbf16>
    %cst_82 = arith.constant dense<0.000000e+00> : vector<32x256xf32>
    %129 = tpu.matmul %127, %128, %cst_82 {dimension_numbers = #tpu.dot_dimension_numbers<[1], [0], [0], [1], [0, 0, 1, 1], [], []>} : vector<32x32xbf16>, vector<32x256xbf16>, vector<32x256xf32> -> vector<32x256xf32>
    %130 = arith.addf %125, %129 : vector<32x256xf32>
    %c255_i32_83 = arith.constant 255 : i32
    %131 = tpu.dynamic_rotate %88 by %c255_i32_83 dim 1 : vector<32x256xf32>, i32 -> vector<32x256xf32>
    %c5_84 = arith.constant 5 : index
    %c0_85 = arith.constant 0 : index
    %132 = vector.load %arg2[%c5_84, %c0_85] : memref<9x256xf32, #tpu.memory_space<vmem>>, vector<1x256xf32>
    %133 = vector.broadcast %132 : vector<1x256xf32> to vector<32x256xf32>
    %134 = arith.mulf %131, %133 : vector<32x256xf32>
    %c5_86 = arith.constant 5 : index
    %c0_87 = arith.constant 0 : index
    %c0_88 = arith.constant 0 : index
    %135 = vector.load %arg5[%c5_86, %c0_87, %c0_88] : memref<9x32x32xbf16, #tpu.memory_space<vmem>>, vector<1x32x32xbf16>
    %136 = vector.shape_cast %135 : vector<1x32x32xbf16> to vector<32x32xbf16>
    %137 = arith.truncf %134 : vector<32x256xf32> to vector<32x256xbf16>
    %cst_89 = arith.constant dense<0.000000e+00> : vector<32x256xf32>
    %138 = tpu.matmul %136, %137, %cst_89 {dimension_numbers = #tpu.dot_dimension_numbers<[1], [0], [0], [1], [0, 0, 1, 1], [], []>} : vector<32x32xbf16>, vector<32x256xbf16>, vector<32x256xf32> -> vector<32x256xf32>
    %139 = arith.addf %130, %138 : vector<32x256xf32>
    %c241_i32_90 = arith.constant 241 : i32
    %140 = tpu.dynamic_rotate %88 by %c241_i32_90 dim 1 : vector<32x256xf32>, i32 -> vector<32x256xf32>
    %c6_91 = arith.constant 6 : index
    %c0_92 = arith.constant 0 : index
    %141 = vector.load %arg2[%c6_91, %c0_92] : memref<9x256xf32, #tpu.memory_space<vmem>>, vector<1x256xf32>
    %142 = vector.broadcast %141 : vector<1x256xf32> to vector<32x256xf32>
    %143 = arith.mulf %140, %142 : vector<32x256xf32>
    %c6_93 = arith.constant 6 : index
    %c0_94 = arith.constant 0 : index
    %c0_95 = arith.constant 0 : index
    %144 = vector.load %arg5[%c6_93, %c0_94, %c0_95] : memref<9x32x32xbf16, #tpu.memory_space<vmem>>, vector<1x32x32xbf16>
    %145 = vector.shape_cast %144 : vector<1x32x32xbf16> to vector<32x32xbf16>
    %146 = arith.truncf %143 : vector<32x256xf32> to vector<32x256xbf16>
    %cst_96 = arith.constant dense<0.000000e+00> : vector<32x256xf32>
    %147 = tpu.matmul %145, %146, %cst_96 {dimension_numbers = #tpu.dot_dimension_numbers<[1], [0], [0], [1], [0, 0, 1, 1], [], []>} : vector<32x32xbf16>, vector<32x256xbf16>, vector<32x256xf32> -> vector<32x256xf32>
    %148 = arith.addf %139, %147 : vector<32x256xf32>
    %c240_i32_97 = arith.constant 240 : i32
    %149 = tpu.dynamic_rotate %88 by %c240_i32_97 dim 1 : vector<32x256xf32>, i32 -> vector<32x256xf32>
    %c7_98 = arith.constant 7 : index
    %c0_99 = arith.constant 0 : index
    %150 = vector.load %arg2[%c7_98, %c0_99] : memref<9x256xf32, #tpu.memory_space<vmem>>, vector<1x256xf32>
    %151 = vector.broadcast %150 : vector<1x256xf32> to vector<32x256xf32>
    %152 = arith.mulf %149, %151 : vector<32x256xf32>
    %c7_100 = arith.constant 7 : index
    %c0_101 = arith.constant 0 : index
    %c0_102 = arith.constant 0 : index
    %153 = vector.load %arg5[%c7_100, %c0_101, %c0_102] : memref<9x32x32xbf16, #tpu.memory_space<vmem>>, vector<1x32x32xbf16>
    %154 = vector.shape_cast %153 : vector<1x32x32xbf16> to vector<32x32xbf16>
    %155 = arith.truncf %152 : vector<32x256xf32> to vector<32x256xbf16>
    %cst_103 = arith.constant dense<0.000000e+00> : vector<32x256xf32>
    %156 = tpu.matmul %154, %155, %cst_103 {dimension_numbers = #tpu.dot_dimension_numbers<[1], [0], [0], [1], [0, 0, 1, 1], [], []>} : vector<32x32xbf16>, vector<32x256xbf16>, vector<32x256xf32> -> vector<32x256xf32>
    %157 = arith.addf %148, %156 : vector<32x256xf32>
    %c239_i32_104 = arith.constant 239 : i32
    %158 = tpu.dynamic_rotate %88 by %c239_i32_104 dim 1 : vector<32x256xf32>, i32 -> vector<32x256xf32>
    %c8_105 = arith.constant 8 : index
    %c0_106 = arith.constant 0 : index
    %159 = vector.load %arg2[%c8_105, %c0_106] : memref<9x256xf32, #tpu.memory_space<vmem>>, vector<1x256xf32>
    %160 = vector.broadcast %159 : vector<1x256xf32> to vector<32x256xf32>
    %161 = arith.mulf %158, %160 : vector<32x256xf32>
    %c8_107 = arith.constant 8 : index
    %c0_108 = arith.constant 0 : index
    %c0_109 = arith.constant 0 : index
    %162 = vector.load %arg5[%c8_107, %c0_108, %c0_109] : memref<9x32x32xbf16, #tpu.memory_space<vmem>>, vector<1x32x32xbf16>
    %163 = vector.shape_cast %162 : vector<1x32x32xbf16> to vector<32x32xbf16>
    %164 = arith.truncf %161 : vector<32x256xf32> to vector<32x256xbf16>
    %cst_110 = arith.constant dense<0.000000e+00> : vector<32x256xf32>
    %165 = tpu.matmul %163, %164, %cst_110 {dimension_numbers = #tpu.dot_dimension_numbers<[1], [0], [0], [1], [0, 0, 1, 1], [], []>} : vector<32x32xbf16>, vector<32x256xbf16>, vector<32x256xf32> -> vector<32x256xf32>
    %166 = arith.addf %157, %165 : vector<32x256xf32>
    %c0_111 = arith.constant 0 : index
    %c0_112 = arith.constant 0 : index
    %167 = vector.load %arg6[%c0_111, %c0_112] : memref<32x1xf32, #tpu.memory_space<vmem>>, vector<32x1xf32>
    %168 = vector.broadcast %167 : vector<32x1xf32> to vector<32x256xf32>
    %169 = arith.addf %166, %168 : vector<32x256xf32>
    %cst_113 = arith.constant 0.000000e+00 : f32
    %170 = vector.broadcast %cst_113 : f32 to vector<32x256xf32>
    %171 = arith.cmpf oge, %169, %170 : vector<32x256xf32>
    %cst_114 = arith.constant 5.000000e-02 : f32
    %172 = vector.broadcast %cst_114 : f32 to vector<32x256xf32>
    %173 = arith.mulf %172, %169 : vector<32x256xf32>
    %174 = arith.select %171, %169, %173 : vector<32x256xi1>, vector<32x256xf32>
    %c0_115 = arith.constant 0 : index
    %c0_116 = arith.constant 0 : index
    %c0_117 = arith.constant 0 : index
    %175 = vector.load %arg7[%c0_115, %c0_116, %c0_117] : memref<1x32x256xf32, #tpu.memory_space<vmem>>, vector<1x32x256xf32>
    %176 = vector.shape_cast %175 : vector<1x32x256xf32> to vector<32x256xf32>
    %177 = vector.shape_cast %174 : vector<32x256xf32> to vector<1x32x256xf32>
    tpu.vector_store %arg7[%c0_115, %c0_116, %c0_117], %177 {strides = array<i32>} : memref<1x32x256xf32, #tpu.memory_space<vmem>>, vector<1x32x256xf32>,
    return
  }
  func.func @transform_0(%arg0: i32) -> (i32, i32, i32) {
    %c0_i32 = arith.constant 0 : i32
    %c0_i32_0 = arith.constant 0 : i32
    %c0_i32_1 = arith.constant 0 : i32
    return %arg0, %c0_i32, %c0_i32_0 : i32, i32, i32
  }
  func.func @transform_1(%arg0: i32) -> (i32, i32) {
    %c0_i32 = arith.constant 0 : i32
    %c0_i32_0 = arith.constant 0 : i32
    %c0_i32_1 = arith.constant 0 : i32
    return %c0_i32, %c0_i32_0 : i32, i32
  }
  func.func @transform_2(%arg0: i32) -> (i32, i32, i32) {
    %c0_i32 = arith.constant 0 : i32
    %c0_i32_0 = arith.constant 0 : i32
    %c0_i32_1 = arith.constant 0 : i32
    %c0_i32_2 = arith.constant 0 : i32
    return %c0_i32, %c0_i32_0, %c0_i32_1 : i32, i32, i32
  }
  func.func @transform_3(%arg0: i32) -> (i32, i32) {
    %c0_i32 = arith.constant 0 : i32
    %c0_i32_0 = arith.constant 0 : i32
    %c0_i32_1 = arith.constant 0 : i32
    return %c0_i32, %c0_i32_0 : i32, i32
  }
  func.func @transform_4(%arg0: i32) -> (i32, i32, i32) {
    %c0_i32 = arith.constant 0 : i32
    %c0_i32_0 = arith.constant 0 : i32
    %c0_i32_1 = arith.constant 0 : i32
    %c0_i32_2 = arith.constant 0 : i32
    return %c0_i32, %c0_i32_0, %c0_i32_1 : i32, i32, i32
  }
  func.func @transform_5(%arg0: i32) -> (i32, i32) {
    %c0_i32 = arith.constant 0 : i32
    %c0_i32_0 = arith.constant 0 : i32
    %c0_i32_1 = arith.constant 0 : i32
    return %c0_i32, %c0_i32_0 : i32, i32
  }
  func.func @transform_6(%arg0: i32) -> (i32, i32, i32) {
    %c0_i32 = arith.constant 0 : i32
    %c0_i32_0 = arith.constant 0 : i32
    %c0_i32_1 = arith.constant 0 : i32
    return %arg0, %c0_i32, %c0_i32_0 : i32, i32, i32
  }
}

</mosaic_0001>

<llo_original>
// kernel: fblock_forward.1
$region0: #{fblock_forward.1}
  #allocation0 [shape = 'u32[]', space=smem, size = 0x4, offset = 0x4, fixed_abs, tag = 'smem constant byte address 0x4 - core index']
  #allocation1 [shape = 'u32[144,128]{1,0:T(1,128)}', space=vmem, size = 0x12000, scoped, tag = 'internal scratch']
  %s0 = inlined_call_operand.vmem [shape: bf16[2,3,256], index: 0, kind: input, shape index: {}]
  %s1 = inlined_call_operand.vmem [shape: f32[9,256], index: 1, kind: input, shape index: {}]
  %s2 = inlined_call_operand.vmem [shape: bf16[9,32,3], index: 2, kind: input, shape index: {}]
  %s3 = inlined_call_operand.vmem [shape: f32[32,1], index: 3, kind: input, shape index: {}]
  %s4 = inlined_call_operand.vmem [shape: bf16[9,32,32], index: 4, kind: input, shape index: {}]
  %s5 = inlined_call_operand.vmem [shape: f32[32,1], index: 5, kind: input, shape index: {}]
  %s6 = inlined_call_operand.vmem [shape: f32[2,32,256], index: 6, kind: output, shape index: {}]
  %s7 = sld [smem:[#allocation0]]
  $region57: #{fblock_forward.1} parent=0
    _
  %s9 = ssub.s32 1, %s7
  %s10 = scalar_select 0, %s9, %s7
  loop: start=0, step=1, limit=4
  $region2: #{fblock_forward.1} parent=0 // loop_pre_header
    _
  $region3: #{fblock_forward.1} parent=0 // loop_header
    %s12 = sphi 0, %s16
    %p13 = scmp.ge.s32.totalorder %s12, 4
    %s22 = sphi 0, %s24
    %s25 = sphi 0, %s22
    %s26 = sphi 0, %s25
    %s42 = sphi 0, %s26
    %s46 = sphi 0, %s46
    %s48 = sphi 0, %s46
    %s49 = sphi 0, %s48
    %s63 = sphi 0, %s49
    %s67 = sphi 0, %s67
    %s69 = sphi 0, %s67
    %s70 = sphi 0, %s69
    %s84 = sphi 0, %s70
    %s88 = sphi 0, %s88
    %s90 = sphi 0, %s88
    %s91 = sphi 0, %s90
    %s105 = sphi 0, %s91
    %s109 = sphi 0, %s109
    %s111 = sphi 0, %s109
    %s112 = sphi 0, %s111
    %s126 = sphi 0, %s112
    %s130 = sphi 0, %s130
    %s132 = sphi 0, %s130
    %s133 = sphi 0, %s132
    %s147 = sphi 0, %s133
    %s153 = sphi 0, %s155
    %s156 = sphi 0, %s153
    %s157 = sphi 0, %s156
    %s173 = sphi 0, %s157
  $region4: #{fblock_forward.1} parent=0 // loop_header_branch
    %15 = sbr.rel (%p13) target = $region8
  $region5: #{fblock_forward.1} parent=0 // loop_body
    %s17 = ssub.s32 %s12, 1
    %s18 = ssub.s32 %s12, 2
    %s19 = sadd.s32 %s12, 1
    %s20 = ssub.s32 %s12, %s19
    %p21 = scmp.eq.s32.totalorder %s20, 0
    %s23 = sadd.s32 %s22, 1
    %s24 = scalar_select %p21, %s22, %s23
    %p27 = pneg %p21
    %p28 = scmp.eq.s32.totalorder %s12, 1
    %p29 = por %p27, %p28
    %p30 = scmp.ne.s32.totalorder %s22, %s25
    %p31 = scmp.eq.s32.totalorder %s12, 0
    %p32 = por %p30, %p31
    %p33 = scmp.ne.s32.totalorder %s22, %s25
    %p34 = scmp.eq.s32.totalorder %s17, 1
    %p35 = por %p33, %p34
    %p36 = scmp.ne.s32.totalorder %s25, %s26
    %p37 = scmp.eq.s32.totalorder %s17, 0
    %p38 = por %p36, %p37
    %p39 = scmp.ne.s32.totalorder %s25, %s26
    %p40 = scmp.eq.s32.totalorder %s18, 1
    %p41 = por %p39, %p40
    %p43 = scmp.ne.s32.totalorder %s26, %s42
    %p44 = scmp.eq.s32.totalorder %s18, 0
    %p45 = por %p43, %p44
    %s47 = sadd.s32 %s46, 1
    %p50 = scmp.eq.s32.totalorder %s12, 1
    %p51 = scmp.ne.s32.totalorder %s46, %s48
    %p52 = scmp.eq.s32.totalorder %s12, 0
    %p53 = por %p51, %p52
    %p54 = scmp.ne.s32.totalorder %s46, %s48
    %p55 = scmp.eq.s32.totalorder %s17, 1
    %p56 = por %p54, %p55
    %p57 = scmp.ne.s32.totalorder %s48, %s49
    %p58 = scmp.eq.s32.totalorder %s17, 0
    %p59 = por %p57, %p58
    %p60 = scmp.ne.s32.totalorder %s48, %s49
    %p61 = scmp.eq.s32.totalorder %s18, 1
    %p62 = por %p60, %p61
    %p64 = scmp.ne.s32.totalorder %s49, %s63
    %p65 = scmp.eq.s32.totalorder %s18, 0
    %p66 = por %p64, %p65
    %s68 = sadd.s32 %s67, 1
    %p71 = scmp.eq.s32.totalorder %s12, 1
    %p72 = scmp.ne.s32.totalorder %s67, %s69
    %p73 = scmp.eq.s32.totalorder %s12, 0
    %p74 = por %p72, %p73
    %p75 = scmp.ne.s32.totalorder %s67, %s69
    %p76 = scmp.eq.s32.totalorder %s17, 1
    %p77 = por %p75, %p76
    %p78 = scmp.ne.s32.totalorder %s69, %s70
    %p79 = scmp.eq.s32.totalorder %s17, 0
    %p80 = por %p78, %p79
    %p81 = scmp.ne.s32.totalorder %s69, %s70
    %p82 = scmp.eq.s32.totalorder %s18, 1
    %p83 = por %p81, %p82
    %p85 = scmp.ne.s32.totalorder %s70, %s84
    %p86 = scmp.eq.s32.totalorder %s18, 0
    %p87 = por %p85, %p86
    %s89 = sadd.s32 %s88, 1
    %p92 = scmp.eq.s32.totalorder %s12, 1
    %p93 = scmp.ne.s32.totalorder %s88, %s90
    %p94 = scmp.eq.s32.totalorder %s12, 0
    %p95 = por %p93, %p94
    %p96 = scmp.ne.s32.totalorder %s88, %s90
    %p97 = scmp.eq.s32.totalorder %s17, 1
    %p98 = por %p96, %p97
    %p99 = scmp.ne.s32.totalorder %s90, %s91
    %p100 = scmp.eq.s32.totalorder %s17, 0
    %p101 = por %p99, %p100
    %p102 = scmp.ne.s32.totalorder %s90, %s91
    %p103 = scmp.eq.s32.totalorder %s18, 1
    %p104 = por %p102, %p103
    %p106 = scmp.ne.s32.totalorder %s91, %s105
    %p107 = scmp.eq.s32.totalorder %s18, 0
    %p108 = por %p106, %p107
    %s110 = sadd.s32 %s109, 1
    %p113 = scmp.eq.s32.totalorder %s12, 1
    %p114 = scmp.ne.s32.totalorder %s109, %s111
    %p115 = scmp.eq.s32.totalorder %s12, 0
    %p116 = por %p114, %p115
    %p117 = scmp.ne.s32.totalorder %s109, %s111
    %p118 = scmp.eq.s32.totalorder %s17, 1
    %p119 = por %p117, %p118
    %p120 = scmp.ne.s32.totalorder %s111, %s112
    %p121 = scmp.eq.s32.totalorder %s17, 0
    %p122 = por %p120, %p121
    %p123 = scmp.ne.s32.totalorder %s111, %s112
    %p124 = scmp.eq.s32.totalorder %s18, 1
    %p125 = por %p123, %p124
    %p127 = scmp.ne.s32.totalorder %s112, %s126
    %p128 = scmp.eq.s32.totalorder %s18, 0
    %p129 = por %p127, %p128
    %s131 = sadd.s32 %s130, 1
    %p134 = scmp.eq.s32.totalorder %s12, 1
    %p135 = scmp.ne.s32.totalorder %s130, %s132
    %p136 = scmp.eq.s32.totalorder %s12, 0
    %p137 = por %p135, %p136
    %p138 = scmp.ne.s32.totalorder %s130, %s132
    %p139 = scmp.eq.s32.totalorder %s17, 1
    %p140 = por %p138, %p139
    %p141 = scmp.ne.s32.totalorder %s132, %s133
    %p142 = scmp.eq.s32.totalorder %s17, 0
    %p143 = por %p141, %p142
    %p144 = scmp.ne.s32.totalorder %s132, %s133
    %p145 = scmp.eq.s32.totalorder %s18, 1
    %p146 = por %p144, %p145
    %p148 = scmp.ne.s32.totalorder %s133, %s147
    %p149 = scmp.eq.s32.totalorder %s18, 0
    %p150 = por %p148, %p149
    %s151 = ssub.s32 %s12, %s19
    %p152 = scmp.eq.s32.totalorder %s151, 0
    %s154 = sadd.s32 %s153, 1
    %s155 = scalar_select %p152, %s153, %s154
    %p158 = pneg %p152
    %p159 = scmp.eq.s32.totalorder %s12, 1
    %p160 = por %p158, %p159
    %p161 = scmp.ne.s32.totalorder %s153, %s156
    %p162 = scmp.eq.s32.totalorder %s12, 0
    %p163 = por %p161, %p162
    %p164 = scmp.ne.s32.totalorder %s153, %s156
    %p165 = scmp.eq.s32.totalorder %s17, 1
    %p166 = por %p164, %p165
    %p167 = scmp.ne.s32.totalorder %s156, %s157
    %p168 = scmp.eq.s32.totalorder %s17, 0
    %p169 = por %p167, %p168
    %p170 = scmp.ne.s32.totalorder %s156, %s157
    %p171 = scmp.eq.s32.totalorder %s18, 1
    %p172 = por %p170, %p171
    %p174 = scmp.ne.s32.totalorder %s157, %s173
    %p175 = scmp.eq.s32.totalorder %s18, 0
    %p176 = por %p174, %p175
    %p177 = scmp.le.s32.totalorder 1, %s12
    %p178 = scmp.lt.s32.totalorder %s12, 3
    %p179 = pnand %p177, %p178
    %p180 = pneg %p179
    // Predicated region
    $region9: #{fblock_forward.1} parent=5 // pred_check
      _
    $region10: #{fblock_forward.1} parent=5 // pred_check_branch
      %182 = sbr.rel (%p179) target = $region12
    $region11: #{fblock_forward.1} parent=5 // pred_region
      %s183 = ssub.s32 %s12, 1
      // Predicated region
      $region13: #{fblock_forward.1} parent=11 // pred_check
        %p184 = pneg %p59
      $region14: #{fblock_forward.1} parent=11 // pred_check_branch
        %186 = sbr.rel (%p184) target = $region16
      $region15: #{fblock_forward.1} parent=11 // pred_region
        _
      $region16: #{fblock_forward.1} parent=11 // pred_fallthru
        _
      // Predicated region
      $region17: #{fblock_forward.1} parent=11 // pred_check
        %p187 = pneg %p80
      $region18: #{fblock_forward.1} parent=11 // pred_check_branch
        %189 = sbr.rel (%p187) target = $region20
      $region19: #{fblock_forward.1} parent=11 // pred_region
        _
      $region20: #{fblock_forward.1} parent=11 // pred_fallthru
        _
      // Predicated region
      $region21: #{fblock_forward.1} parent=11 // pred_check
        %p190 = pneg %p101
      $region22: #{fblock_forward.1} parent=11 // pred_check_branch
        %192 = sbr.rel (%p190) target = $region24
      $region23: #{fblock_forward.1} parent=11 // pred_region
        _
      $region24: #{fblock_forward.1} parent=11 // pred_fallthru
        _
      // Predicated region
      $region25: #{fblock_forward.1} parent=11 // pred_check
        %p193 = pneg %p122
      $region26: #{fblock_forward.1} parent=11 // pred_check_branch
        %195 = sbr.rel (%p193) target = $region28
      $region27: #{fblock_forward.1} parent=11 // pred_region
        _
      $region28: #{fblock_forward.1} parent=11 // pred_fallthru
        _
      // Predicated region
      $region29: #{fblock_forward.1} parent=11 // pred_check
        %p196 = pneg %p143
      $region30: #{fblock_forward.1} parent=11 // pred_check_branch
        %198 = sbr.rel (%p196) target = $region32
      $region31: #{fblock_forward.1} parent=11 // pred_region
        _
      $region32: #{fblock_forward.1} parent=11 // pred_fallthru
        _
    $region12: #{fblock_forward.1} parent=5 // pred_fallthru
      _
    %p199 = scmp.lt.s32.totalorder %s12, 2
    // Predicated region
    $region33: #{fblock_forward.1} parent=5 // pred_check
      %p200 = pneg %p199
    $region34: #{fblock_forward.1} parent=5 // pred_check_branch
      %202 = sbr.rel (%p200) target = $region36
    $region35: #{fblock_forward.1} parent=5 // pred_region
      // Predicated region
      $region37: #{fblock_forward.1} parent=35 // pred_check
        %p203 = pneg %p32
      $region38: #{fblock_forward.1} parent=35 // pred_check_branch
        %205 = sbr.rel (%p203) target = $region40
      $region39: #{fblock_forward.1} parent=35 // pred_region
        %p206 = scmp.lt.s32.totalorder %s12, 1
        %s207 = scalar_select %p206, %s12, 1
        %s208 = smul.addr %s207, 2
        %s209 = smul.addr %s208, 2
        %s210 = scalar_lea.vmem %s0, %s209
      $region40: #{fblock_forward.1} parent=35 // pred_fallthru
        _
    $region36: #{fblock_forward.1} parent=5 // pred_fallthru
      _
    %p211 = scmp.le.s32.totalorder 1, %s12
    %p212 = scmp.lt.s32.totalorder %s12, 3
    %p213 = pnand %p211, %p212
    %p214 = pneg %p213
    // Predicated region
    $region41: #{fblock_forward.1} parent=5 // pred_check
      _
    $region42: #{fblock_forward.1} parent=5 // pred_check_branch
      %216 = sbr.rel (%p213) target = $region44
    $region43: #{fblock_forward.1} parent=5 // pred_region
      %s217 = ssub.s32 %s12, 1
      %p218 = scmp.lt.s32.totalorder %s17, 1
      %s219 = scalar_select %p218, %s17, 1
      %s220 = smul.addr %s219, 2
      %s221 = smul.addr %s220, 2
      %s222 = scalar_lea.vmem %s0, %s221
      %p223 = pneg %p38
      %p224 = pneg %p35
      %p225 = pneg %p59
      %p226 = pneg %p56
      %p227 = pneg %p80
      %p228 = pneg %p77
      %p229 = pneg %p101
      %p230 = pneg %p98
      %p231 = pneg %p122
      %p232 = pneg %p119
      %p233 = pneg %p143
      %p234 = pneg %p140
      %p235 = pneg %p169
      %p236 = pneg %p166
      %p237 = scmp.lt.s32.totalorder %s17, 1
      %s238 = scalar_select %p237, %s17, 1
      %s239 = smul.addr %s238, 8
      %s240 = smul.addr %s239, 8
      %s241 = scalar_lea.vmem %s6, %s240
      %p242 = scmp.lt.s32.totalorder %s17, 1
      %s243 = scalar_select %p242, %s17, 1
      %s244 = smul.addr %s243, 2
      %s245 = smul.addr %s244, 2
      %s246 = scalar_lea.vmem %s0, %s245
      %p247 = scmp.lt.s32.totalorder %s17, 1
      %s248 = scalar_select %p247, %s17, 1
      %s249 = smul.addr %s248, 8
      %s250 = smul.addr %s249, 8
      %s251 = scalar_lea.vmem %s6, %s250
      %v253 = vld [vmem:[%s246] sm:$0xf]
      %v254 = vunpack.c.l.bf16 %v253
      %v256 = vcombine.high %v254, %v254
      %258 = vrot.lane.b32.xlu0 %v254, 17
      %v259 = vpop.permute.xlu0 %258
      %260 = vrot.lane.b32.xlu0 %v256, 17
      %v261 = vpop.permute.xlu0 %260
      %v262 = vlaneseq
      %v263 = vand.u32 %v262, 127
      %vm264 = vcmp.lt.s32.totalorder %v263, 17
      %v265 = vsel %vm264, %v259, %v261
      %v266 = vsel %vm264, %v261, %v259
      %v267 = vld [vmem:[%s1] ss:$8 sm:$0x3]
      %v269 = vlaneseq
      %v270 = vshrl.u32 %v269, 7
      %v271 = vsub.s32 0, %v270
      %v272 = vrot.slane %v267, %v271
      %v273 = vlaneseq
      %v274 = vshrl.u32 %v273, 7
      %v275 = vsub.s32 1, %v274
      %v276 = vrot.slane %v267, %v275
      %v279 = vmul.f32 %v266, %v272
      %v280 = vmul.f32 %v265, %v276
      %v281 = vld [vmem:[%s2] sm:$0xf]
      %v282 = vld [vmem:[%s2 + $0x4] sm:$0xf]
      %v283 = vld [vmem:[%s2 + $0x8] sm:$0xf]
      %v284 = vld [vmem:[%s2 + $0xc] sm:$0xf]
      %v285 = vpack.c.bf16 %v279, %v279
      %v286 = vpack.c.bf16 %v280, %v280
      %287 = vrot.lane.b32.xlu0 %v254, 16
      %v288 = vpop.permute.xlu0 %287
      %289 = vrot.lane.b32.xlu0 %v256, 16
      %v290 = vpop.permute.xlu0 %289
      %vm291 = vcmp.lt.s32.totalorder %v263, 16
      %v292 = vsel %vm291, %v288, %v290
      %v293 = vsel %vm291, %v290, %v288
      %s294 = scalar_lea.vmem %s1, 1
      %v295 = vld [vmem:[%s294] ss:$8 sm:$0x3]
      %v297 = vlaneseq
      %v298 = vshrl.u32 %v297, 7
      %v299 = vsub.s32 0, %v298
      %v300 = vrot.slane %v295, %v299
      %v301 = vlaneseq
      %v302 = vshrl.u32 %v301, 7
      %v303 = vsub.s32 1, %v302
      %v304 = vrot.slane %v295, %v303
      %v307 = vmul.f32 %v293, %v300
      %v308 = vmul.f32 %v292, %v304
      %s309 = scalar_lea.vmem %s2, 16
      %v310 = vld [vmem:[%s309] sm:$0xf]
      %v311 = vld [vmem:[%s309 + $0x4] sm:$0xf]
      %v312 = vld [vmem:[%s309 + $0x8] sm:$0xf]
      %v313 = vld [vmem:[%s309 + $0xc] sm:$0xf]
      %v314 = vpack.c.bf16 %v307, %v307
      %v315 = vpack.c.bf16 %v308, %v308
      %v320 = vunpack.c.l.b16 %v310
      %v321 = vunpack.c.l.b16 %v311
      %v322 = vunpack.c.l.b16 %v312
      %v323 = vunpack.c.l.b16 %v313
      %v324 = vpack.c.b16 %v321, %v320
      %v325 = vpack.c.b16 %v323, %v322
      %vm326 = vcmask 23552
      %v328 = vsel %vm326, %v324, 0
      %v331 = vsel %vm326, %v325, 0
      %vm333 = vcmask 1040384
      %vm334 = vcmask 1041408
      %v335 = vsel %vm333, 4294967295, 65535
      %v336 = vsel %vm334, %v335, 0
      %v338 = vand.u32 %v314, %v336
      %v341 = vand.u32 %v315, %v336
      %343 = vmatprep.subr.bf16.mxu0 %v341
      %344 = vmatpush1.bf16.msra.mxu0 %v338
      %345 = vmatprep.subr.bf16.mxu0 0
      %346 = vmatpush1.bf16.msra.mxu0 0
      %347 = vmatprep.subr.bf16.mxu0 0
      %348 = vmatpush1.bf16.msra.mxu0 0
      %349 = vmatprep.subr.bf16.mxu0 0
      %350 = vmatpush1.bf16.msra.mxu0 0
      %351 = vmatprep.subr.bf16.mxu0 0
      %352 = vmatpush1.bf16.msra.mxu0 0
      %353 = vmatprep.subr.bf16.mxu0 0
      %354 = vmatpush1.bf16.msra.mxu0 0
      %355 = vmatprep.subr.bf16.mxu0 0
      %356 = vmatpush1.bf16.msra.mxu0 0
      %357 = vmatprep.subr.bf16.mxu0 0
      %358 = vmatpush1.bf16.msra.mxu0 0
      %359 = vmatprep.subr.bf16.mxu0 0
      %360 = vmatpush1.bf16.msra.mxu0 0
      %361 = vmatprep.subr.bf16.mxu0 0
      %362 = vmatpush1.bf16.msra.mxu0 0
      %363 = vmatprep.subr.bf16.mxu0 0
      %364 = vmatpush1.bf16.msra.mxu0 0
      %365 = vmatprep.subr.bf16.mxu0 0
      %366 = vmatpush1.bf16.msra.mxu0 0
      %367 = vmatprep.subr.bf16.mxu0 0
      %368 = vmatpush1.bf16.msra.mxu0 0
      %369 = vmatprep.subr.bf16.mxu0 0
      %370 = vmatpush1.bf16.msra.mxu0 0
      %371 = vmatprep.subr.bf16.mxu0 0
      %372 = vmatpush1.bf16.msra.mxu0 0
      %373 = vmatprep.subr.bf16.mxu0 0
      %374 = vmatpush1.bf16.msra.mxu0 0
      %375 = vmatprep.mubr.bf16.mxu0 0
      %376 = vmatmul.mubr.bf16.gmra.mrb[0].mxu0 %v328
      %v377 = vpop.f32.mrb[0].mxu0
      %v378 = vadd.f32 0.0, %v377
      %v379 = vpop.f32.mrb[0].mxu0
      %v380 = vadd.f32 0.0, %v379
      %v381 = vpop.f32.mrb[0].mxu0
      %v382 = vadd.f32 0.0, %v381
      %v383 = vpop.f32.mrb[0].mxu0
      %v384 = vadd.f32 0.0, %v383
      %385 = vmatprep.mubr.bf16.mxu0 0
      %386 = vmatmul.mubr.bf16.gmra.mrb[0].mxu0 %v331
      %v387 = vpop.f32.mrb[0].mxu0
      %v388 = vadd.f32 0.0, %v387
      %v389 = vpop.f32.mrb[0].mxu0
      %v390 = vadd.f32 0.0, %v389
      %v391 = vpop.f32.mrb[0].mxu0
      %v392 = vadd.f32 0.0, %v391
      %v393 = vpop.f32.mrb[0].mxu0
      %v394 = vadd.f32 0.0, %v393
      %395 = vdwg.mxu0
      %v400 = vunpack.c.l.b16 %v281
      %v401 = vunpack.c.l.b16 %v282
      %v402 = vunpack.c.l.b16 %v283
      %v403 = vunpack.c.l.b16 %v284
      %v404 = vpack.c.b16 %v401, %v400
      %v405 = vpack.c.b16 %v403, %v402
      %v407 = vsel %vm326, %v404, 0
      %v410 = vsel %vm326, %v405, 0
      %v413 = vand.u32 %v285, %v336
      %v416 = vand.u32 %v286, %v336
      %418 = vmatprep.subr.bf16.mxu0 %v416
      %419 = vmatpush1.bf16.msra.mxu0 %v413
      %420 = vmatprep.subr.bf16.mxu0 0
      %421 = vmatpush1.bf16.msra.mxu0 0
      %422 = vmatprep.subr.bf16.mxu0 0
      %423 = vmatpush1.bf16.msra.mxu0 0
      %424 = vmatprep.subr.bf16.mxu0 0
      %425 = vmatpush1.bf16.msra.mxu0 0
      %426 = vmatprep.subr.bf16.mxu0 0
      %427 = vmatpush1.bf16.msra.mxu0 0
      %428 = vmatprep.subr.bf16.mxu0 0
      %429 = vmatpush1.bf16.msra.mxu0 0
      %430 = vmatprep.subr.bf16.mxu0 0
      %431 = vmatpush1.bf16.msra.mxu0 0
      %432 = vmatprep.subr.bf16.mxu0 0
      %433 = vmatpush1.bf16.msra.mxu0 0
      %434 = vmatprep.subr.bf16.mxu0 0
      %435 = vmatpush1.bf16.msra.mxu0 0
      %436 = vmatprep.subr.bf16.mxu0 0
      %437 = vmatpush1.bf16.msra.mxu0 0
      %438 = vmatprep.subr.bf16.mxu0 0
      %439 = vmatpush1.bf16.msra.mxu0 0
      %440 = vmatprep.subr.bf16.mxu0 0
      %441 = vmatpush1.bf16.msra.mxu0 0
      %442 = vmatprep.subr.bf16.mxu0 0
      %443 = vmatpush1.bf16.msra.mxu0 0
      %444 = vmatprep.subr.bf16.mxu0 0
      %445 = vmatpush1.bf16.msra.mxu0 0
      %446 = vmatprep.subr.bf16.mxu0 0
      %447 = vmatpush1.bf16.msra.mxu0 0
      %448 = vmatprep.subr.bf16.mxu0 0
      %449 = vmatpush1.bf16.msra.mxu0 0
      %450 = vmatprep.mubr.bf16.mxu0 0
      %451 = vmatmul.mubr.bf16.gmra.mrb[0].mxu0 %v407
      %v452 = vpop.f32.mrb[0].mxu0
      %v453 = vadd.f32 %v378, %v452
      %v454 = vpop.f32.mrb[0].mxu0
      %v455 = vadd.f32 %v380, %v454
      %v456 = vpop.f32.mrb[0].mxu0
      %v457 = vadd.f32 %v382, %v456
      %v458 = vpop.f32.mrb[0].mxu0
      %v459 = vadd.f32 %v384, %v458
      %460 = vmatprep.mubr.bf16.mxu0 0
      %461 = vmatmul.mubr.bf16.gmra.mrb[0].mxu0 %v410
      %v462 = vpop.f32.mrb[0].mxu0
      %v463 = vadd.f32 %v388, %v462
      %v464 = vpop.f32.mrb[0].mxu0
      %v465 = vadd.f32 %v390, %v464
      %v466 = vpop.f32.mrb[0].mxu0
      %v467 = vadd.f32 %v392, %v466
      %v468 = vpop.f32.mrb[0].mxu0
      %v469 = vadd.f32 %v394, %v468
      %470 = vdwg.mxu0
      %471 = vrot.lane.b32.xlu0 %v254, 15
      %v472 = vpop.permute.xlu0 %471
      %473 = vrot.lane.b32.xlu0 %v256, 15
      %v474 = vpop.permute.xlu0 %473
      %vm475 = vcmp.lt.s32.totalorder %v263, 15
      %v476 = vsel %vm475, %v472, %v474
      %v477 = vsel %vm475, %v474, %v472
      %s478 = scalar_lea.vmem %s1, 2
      %v479 = vld [vmem:[%s478] ss:$8 sm:$0x3]
      %v481 = vlaneseq
      %v482 = vshrl.u32 %v481, 7
      %v483 = vsub.s32 0, %v482
      %v484 = vrot.slane %v479, %v483
      %v485 = vlaneseq
      %v486 = vshrl.u32 %v485, 7
      %v487 = vsub.s32 1, %v486
      %v488 = vrot.slane %v479, %v487
      %v491 = vmul.f32 %v477, %v484
      %v492 = vmul.f32 %v476, %v488
      %s493 = scalar_lea.vmem %s2, 32
      %v494 = vld [vmem:[%s493] sm:$0xf]
      %v495 = vld [vmem:[%s493 + $0x4] sm:$0xf]
      %v496 = vld [vmem:[%s493 + $0x8] sm:$0xf]
      %v497 = vld [vmem:[%s493 + $0xc] sm:$0xf]
      %v498 = vpack.c.bf16 %v491, %v491
      %v499 = vpack.c.bf16 %v492, %v492
      %v504 = vunpack.c.l.b16 %v494
      %v505 = vunpack.c.l.b16 %v495
      %v506 = vunpack.c.l.b16 %v496
      %v507 = vunpack.c.l.b16 %v497
      %v508 = vpack.c.b16 %v505, %v504
      %v509 = vpack.c.b16 %v507, %v506
      %v511 = vsel %vm326, %v508, 0
      %v514 = vsel %vm326, %v509, 0
      %v517 = vand.u32 %v498, %v336
      %v520 = vand.u32 %v499, %v336
      %522 = vmatprep.subr.bf16.mxu0 %v520
      %523 = vmatpush1.bf16.msra.mxu0 %v517
      %524 = vmatprep.subr.bf16.mxu0 0
      %525 = vmatpush1.bf16.msra.mxu0 0
      %526 = vmatprep.subr.bf16.mxu0 0
      %527 = vmatpush1.bf16.msra.mxu0 0
      %528 = vmatprep.subr.bf16.mxu0 0
      %529 = vmatpush1.bf16.msra.mxu0 0
      %530 = vmatprep.subr.bf16.mxu0 0
      %531 = vmatpush1.bf16.msra.mxu0 0
      %532 = vmatprep.subr.bf16.mxu0 0
      %533 = vmatpush1.bf16.msra.mxu0 0
      %534 = vmatprep.subr.bf16.mxu0 0
      %535 = vmatpush1.bf16.msra.mxu0 0
      %536 = vmatprep.subr.bf16.mxu0 0
      %537 = vmatpush1.bf16.msra.mxu0 0
      %538 = vmatprep.subr.bf16.mxu0 0
      %539 = vmatpush1.bf16.msra.mxu0 0
      %540 = vmatprep.subr.bf16.mxu0 0
      %541 = vmatpush1.bf16.msra.mxu0 0
      %542 = vmatprep.subr.bf16.mxu0 0
      %543 = vmatpush1.bf16.msra.mxu0 0
      %544 = vmatprep.subr.bf16.mxu0 0
      %545 = vmatpush1.bf16.msra.mxu0 0
      %546 = vmatprep.subr.bf16.mxu0 0
      %547 = vmatpush1.bf16.msra.mxu0 0
      %548 = vmatprep.subr.bf16.mxu0 0
      %549 = vmatpush1.bf16.msra.mxu0 0
      %550 = vmatprep.subr.bf16.mxu0 0
      %551 = vmatpush1.bf16.msra.mxu0 0
      %552 = vmatprep.subr.bf16.mxu0 0
      %553 = vmatpush1.bf16.msra.mxu0 0
      %554 = vmatprep.mubr.bf16.mxu0 0
      %555 = vmatmul.mubr.bf16.gmra.mrb[0].mxu0 %v511
      %v556 = vpop.f32.mrb[0].mxu0
      %v557 = vadd.f32 0.0, %v556
      %v558 = vpop.f32.mrb[0].mxu0
      %v559 = vadd.f32 0.0, %v558
      %v560 = vpop.f32.mrb[0].mxu0
      %v561 = vadd.f32 0.0, %v560
      %v562 = vpop.f32.mrb[0].mxu0
      %v563 = vadd.f32 0.0, %v562
      %564 = vmatprep.mubr.bf16.mxu0 0
      %565 = vmatmul.mubr.bf16.gmra.mrb[0].mxu0 %v514
      %v566 = vpop.f32.mrb[0].mxu0
      %v567 = vadd.f32 0.0, %v566
      %v568 = vpop.f32.mrb[0].mxu0
      %v569 = vadd.f32 0.0, %v568
      %v570 = vpop.f32.mrb[0].mxu0
      %v571 = vadd.f32 0.0, %v570
      %v572 = vpop.f32.mrb[0].mxu0
      %v573 = vadd.f32 0.0, %v572
      %574 = vdwg.mxu0
      %v575 = vadd.f32 %v453, %v557
      %v576 = vadd.f32 %v455, %v559
      %v577 = vadd.f32 %v457, %v561
      %v578 = vadd.f32 %v459, %v563
      %v579 = vadd.f32 %v463, %v567
      %v580 = vadd.f32 %v465, %v569
      %v581 = vadd.f32 %v467, %v571
      %v582 = vadd.f32 %v469, %v573
      %583 = vrot.lane.b32.xlu0 %v254, 1
      %v584 = vpop.permute.xlu0 %583
      %585 = vrot.lane.b32.xlu0 %v256, 1
      %v586 = vpop.permute.xlu0 %585
      %vm587 = vcmp.lt.s32.totalorder %v263, 1
      %v588 = vsel %vm587, %v584, %v586
      %v589 = vsel %vm587, %v586, %v584
      %s590 = scalar_lea.vmem %s1, 3
      %v591 = vld [vmem:[%s590] ss:$8 sm:$0x3]
      %v593 = vlaneseq
      %v594 = vshrl.u32 %v593, 7
      %v595 = vsub.s32 0, %v594
      %v596 = vrot.slane %v591, %v595
      %v597 = vlaneseq
      %v598 = vshrl.u32 %v597, 7
      %v599 = vsub.s32 1, %v598
      %v600 = vrot.slane %v591, %v599
      %v603 = vmul.f32 %v589, %v596
      %v604 = vmul.f32 %v588, %v600
      %s605 = scalar_lea.vmem %s2, 48
      %v606 = vld [vmem:[%s605] sm:$0xf]
      %v607 = vld [vmem:[%s605 + $0x4] sm:$0xf]
      %v608 = vld [vmem:[%s605 + $0x8] sm:$0xf]
      %v609 = vld [vmem:[%s605 + $0xc] sm:$0xf]
      %v610 = vpack.c.bf16 %v603, %v603
      %v611 = vpack.c.bf16 %v604, %v604
      %v616 = vunpack.c.l.b16 %v606
      %v617 = vunpack.c.l.b16 %v607
      %v618 = vunpack.c.l.b16 %v608
      %v619 = vunpack.c.l.b16 %v609
      %v620 = vpack.c.b16 %v617, %v616
      %v621 = vpack.c.b16 %v619, %v618
      %v623 = vsel %vm326, %v620, 0
      %v626 = vsel %vm326, %v621, 0
      %v629 = vand.u32 %v610, %v336
      %v632 = vand.u32 %v611, %v336
      %634 = vmatprep.subr.bf16.mxu0 %v632
      %635 = vmatpush1.bf16.msra.mxu0 %v629
      %636 = vmatprep.subr.bf16.mxu0 0
      %637 = vmatpush1.bf16.msra.mxu0 0
      %638 = vmatprep.subr.bf16.mxu0 0
      %639 = vmatpush1.bf16.msra.mxu0 0
      %640 = vmatprep.subr.bf16.mxu0 0
      %641 = vmatpush1.bf16.msra.mxu0 0
      %642 = vmatprep.subr.bf16.mxu0 0
      %643 = vmatpush1.bf16.msra.mxu0 0
      %644 = vmatprep.subr.bf16.mxu0 0
      %645 = vmatpush1.bf16.msra.mxu0 0
      %646 = vmatprep.subr.bf16.mxu0 0
      %647 = vmatpush1.bf16.msra.mxu0 0
      %648 = vmatprep.subr.bf16.mxu0 0
      %649 = vmatpush1.bf16.msra.mxu0 0
      %650 = vmatprep.subr.bf16.mxu0 0
      %651 = vmatpush1.bf16.msra.mxu0 0
      %652 = vmatprep.subr.bf16.mxu0 0
      %653 = vmatpush1.bf16.msra.mxu0 0
      %654 = vmatprep.subr.bf16.mxu0 0
      %655 = vmatpush1.bf16.msra.mxu0 0
      %656 = vmatprep.subr.bf16.mxu0 0
      %657 = vmatpush1.bf16.msra.mxu0 0
      %658 = vmatprep.subr.bf16.mxu0 0
      %659 = vmatpush1.bf16.msra.mxu0 0
      %660 = vmatprep.subr.bf16.mxu0 0
      %661 = vmatpush1.bf16.msra.mxu0 0
      %662 = vmatprep.subr.bf16.mxu0 0
      %663 = vmatpush1.bf16.msra.mxu0 0
      %664 = vmatprep.subr.bf16.mxu0 0
      %665 = vmatpush1.bf16.msra.mxu0 0
      %666 = vmatprep.mubr.bf16.mxu0 0
      %667 = vmatmul.mubr.bf16.gmra.mrb[0].mxu0 %v623
      %v668 = vpop.f32.mrb[0].mxu0
      %v669 = vadd.f32 0.0, %v668
      %v670 = vpop.f32.mrb[0].mxu0
      %v671 = vadd.f32 0.0, %v670
      %v672 = vpop.f32.mrb[0].mxu0
      %v673 = vadd.f32 0.0, %v672
      %v674 = vpop.f32.mrb[0].mxu0
      %v675 = vadd.f32 0.0, %v674
      %676 = vmatprep.mubr.bf16.mxu0 0
      %677 = vmatmul.mubr.bf16.gmra.mrb[0].mxu0 %v626
      %v678 = vpop.f32.mrb[0].mxu0
      %v679 = vadd.f32 0.0, %v678
      %v680 = vpop.f32.mrb[0].mxu0
      %v681 = vadd.f32 0.0, %v680
      %v682 = vpop.f32.mrb[0].mxu0
      %v683 = vadd.f32 0.0, %v682
      %v684 = vpop.f32.mrb[0].mxu0
      %v685 = vadd.f32 0.0, %v684
      %686 = vdwg.mxu0
      %v687 = vadd.f32 %v575, %v669
      %v688 = vadd.f32 %v576, %v671
      %v689 = vadd.f32 %v577, %v673
      %v690 = vadd.f32 %v578, %v675
      %v691 = vadd.f32 %v579, %v679
      %v692 = vadd.f32 %v580, %v681
      %v693 = vadd.f32 %v581, %v683
      %v694 = vadd.f32 %v582, %v685
      %s695 = scalar_lea.vmem %s2, 64
      %v696 = vld [vmem:[%s695] sm:$0xf]
      %v697 = vld [vmem:[%s695 + $0x4] sm:$0xf]
      %v698 = vld [vmem:[%s695 + $0x8] sm:$0xf]
      %v699 = vld [vmem:[%s695 + $0xc] sm:$0xf]
      %v704 = vunpack.c.l.b16 %v696
      %v705 = vunpack.c.l.b16 %v697
      %v706 = vunpack.c.l.b16 %v698
      %v707 = vunpack.c.l.b16 %v699
      %v708 = vpack.c.b16 %v705, %v704
      %v709 = vpack.c.b16 %v707, %v706
      %v712 = vunpack.c.l.s4 1983009808
      %v713 = vunpack.c.0.s8 %v712
      %v714 = vlaneseq
      %v715 = vshrl.u32 %v714, 7
      %v716 = vsub.s32 %v713, %v715
      %v717 = vrot.slane %v253, %v716
      %v718 = vcombine.high %v717, %v717
      %v720 = vsel %vm326, %v708, 0
      %v723 = vsel %vm326, %v709, 0
      %v726 = vand.u32 %v717, %v336
      %v729 = vand.u32 %v718, %v336
      %731 = vmatprep.subr.bf16.mxu0 %v729
      %732 = vmatpush1.bf16.msra.mxu0 %v726
      %733 = vmatprep.subr.bf16.mxu0 0
      %734 = vmatpush1.bf16.msra.mxu0 0
      %735 = vmatprep.subr.bf16.mxu0 0
      %736 = vmatpush1.bf16.msra.mxu0 0
      %737 = vmatprep.subr.bf16.mxu0 0
      %738 = vmatpush1.bf16.msra.mxu0 0
      %739 = vmatprep.subr.bf16.mxu0 0
      %740 = vmatpush1.bf16.msra.mxu0 0
      %741 = vmatprep.subr.bf16.mxu0 0
      %742 = vmatpush1.bf16.msra.mxu0 0
      %743 = vmatprep.subr.bf16.mxu0 0
      %744 = vmatpush1.bf16.msra.mxu0 0
      %745 = vmatprep.subr.bf16.mxu0 0
      %746 = vmatpush1.bf16.msra.mxu0 0
      %747 = vmatprep.subr.bf16.mxu0 0
      %748 = vmatpush1.bf16.msra.mxu0 0
      %749 = vmatprep.subr.bf16.mxu0 0
      %750 = vmatpush1.bf16.msra.mxu0 0
      %751 = vmatprep.subr.bf16.mxu0 0
      %752 = vmatpush1.bf16.msra.mxu0 0
      %753 = vmatprep.subr.bf16.mxu0 0
      %754 = vmatpush1.bf16.msra.mxu0 0
      %755 = vmatprep.subr.bf16.mxu0 0
      %756 = vmatpush1.bf16.msra.mxu0 0
      %757 = vmatprep.subr.bf16.mxu0 0
      %758 = vmatpush1.bf16.msra.mxu0 0
      %759 = vmatprep.subr.bf16.mxu0 0
      %760 = vmatpush1.bf16.msra.mxu0 0
      %761 = vmatprep.subr.bf16.mxu0 0
      %762 = vmatpush1.bf16.msra.mxu0 0
      %763 = vmatprep.mubr.bf16.mxu0 0
      %764 = vmatmul.mubr.bf16.gmra.mrb[0].mxu0 %v720
      %v765 = vpop.f32.mrb[0].mxu0
      %v766 = vadd.f32 0.0, %v765
      %v767 = vpop.f32.mrb[0].mxu0
      %v768 = vadd.f32 0.0, %v767
      %v769 = vpop.f32.mrb[0].mxu0
      %v770 = vadd.f32 0.0, %v769
      %v771 = vpop.f32.mrb[0].mxu0
      %v772 = vadd.f32 0.0, %v771
      %773 = vmatprep.mubr.bf16.mxu0 0
      %774 = vmatmul.mubr.bf16.gmra.mrb[0].mxu0 %v723
      %v775 = vpop.f32.mrb[0].mxu0
      %v776 = vadd.f32 0.0, %v775
      %v777 = vpop.f32.mrb[0].mxu0
      %v778 = vadd.f32 0.0, %v777
      %v779 = vpop.f32.mrb[0].mxu0
      %v780 = vadd.f32 0.0, %v779
      %v781 = vpop.f32.mrb[0].mxu0
      %v782 = vadd.f32 0.0, %v781
      %783 = vdwg.mxu0
      %v784 = vadd.f32 %v687, %v766
      %v785 = vadd.f32 %v688, %v768
      %v786 = vadd.f32 %v689, %v770
      %v787 = vadd.f32 %v690, %v772
      %v788 = vadd.f32 %v691, %v776
      %v789 = vadd.f32 %v692, %v778
      %v790 = vadd.f32 %v693, %v780
      %v791 = vadd.f32 %v694, %v782
      %792 = vrot.lane.b32.xlu0 %v254, 127
      %v793 = vpop.permute.xlu0 %792
      %794 = vrot.lane.b32.xlu0 %v256, 127
      %v795 = vpop.permute.xlu0 %794
      %vm796 = vcmp.lt.s32.totalorder %v263, 127
      %v797 = vsel %vm796, %v793, %v795
      %v798 = vsel %vm796, %v795, %v793
      %s799 = scalar_lea.vmem %s1, 5
      %v800 = vld [vmem:[%s799] ss:$8 sm:$0x3]
      %v802 = vlaneseq
      %v803 = vshrl.u32 %v802, 7
      %v804 = vsub.s32 0, %v803
      %v805 = vrot.slane %v800, %v804
      %v806 = vlaneseq
      %v807 = vshrl.u32 %v806, 7
      %v808 = vsub.s32 1, %v807
      %v809 = vrot.slane %v800, %v808
      %v812 = vmul.f32 %v797, %v805
      %v813 = vmul.f32 %v798, %v809
      %s814 = scalar_lea.vmem %s2, 80
      %v815 = vld [vmem:[%s814] sm:$0xf]
      %v816 = vld [vmem:[%s814 + $0x4] sm:$0xf]
      %v817 = vld [vmem:[%s814 + $0x8] sm:$0xf]
      %v818 = vld [vmem:[%s814 + $0xc] sm:$0xf]
      %v819 = vpack.c.bf16 %v812, %v812
      %v820 = vpack.c.bf16 %v813, %v813
      %v825 = vunpack.c.l.b16 %v815
      %v826 = vunpack.c.l.b16 %v816
      %v827 = vunpack.c.l.b16 %v817
      %v828 = vunpack.c.l.b16 %v818
      %v829 = vpack.c.b16 %v826, %v825
      %v830 = vpack.c.b16 %v828, %v827
      %v832 = vsel %vm326, %v829, 0
      %v835 = vsel %vm326, %v830, 0
      %v838 = vand.u32 %v819, %v336
      %v841 = vand.u32 %v820, %v336
      %843 = vmatprep.subr.bf16.mxu0 %v841
      %844 = vmatpush1.bf16.msra.mxu0 %v838
      %845 = vmatprep.subr.bf16.mxu0 0
      %846 = vmatpush1.bf16.msra.mxu0 0
      %847 = vmatprep.subr.bf16.mxu0 0
      %848 = vmatpush1.bf16.msra.mxu0 0
      %849 = vmatprep.subr.bf16.mxu0 0
      %850 = vmatpush1.bf16.msra.mxu0 0
      %851 = vmatprep.subr.bf16.mxu0 0
      %852 = vmatpush1.bf16.msra.mxu0 0
      %853 = vmatprep.subr.bf16.mxu0 0
      %854 = vmatpush1.bf16.msra.mxu0 0
      %855 = vmatprep.subr.bf16.mxu0 0
      %856 = vmatpush1.bf16.msra.mxu0 0
      %857 = vmatprep.subr.bf16.mxu0 0
      %858 = vmatpush1.bf16.msra.mxu0 0
      %859 = vmatprep.subr.bf16.mxu0 0
      %860 = vmatpush1.bf16.msra.mxu0 0
      %861 = vmatprep.subr.bf16.mxu0 0
      %862 = vmatpush1.bf16.msra.mxu0 0
      %863 = vmatprep.subr.bf16.mxu0 0
      %864 = vmatpush1.bf16.msra.mxu0 0
      %865 = vmatprep.subr.bf16.mxu0 0
      %866 = vmatpush1.bf16.msra.mxu0 0
      %867 = vmatprep.subr.bf16.mxu0 0
      %868 = vmatpush1.bf16.msra.mxu0 0
      %869 = vmatprep.subr.bf16.mxu0 0
      %870 = vmatpush1.bf16.msra.mxu0 0
      %871 = vmatprep.subr.bf16.mxu0 0
      %872 = vmatpush1.bf16.msra.mxu0 0
      %873 = vmatprep.subr.bf16.mxu0 0
      %874 = vmatpush1.bf16.msra.mxu0 0
      %875 = vmatprep.mubr.bf16.mxu0 0
      %876 = vmatmul.mubr.bf16.gmra.mrb[0].mxu0 %v832
      %v877 = vpop.f32.mrb[0].mxu0
      %v878 = vadd.f32 0.0, %v877
      %v879 = vpop.f32.mrb[0].mxu0
      %v880 = vadd.f32 0.0, %v879
      %v881 = vpop.f32.mrb[0].mxu0
      %v882 = vadd.f32 0.0, %v881
      %v883 = vpop.f32.mrb[0].mxu0
      %v884 = vadd.f32 0.0, %v883
      %885 = vmatprep.mubr.bf16.mxu0 0
      %886 = vmatmul.mubr.bf16.gmra.mrb[0].mxu0 %v835
      %v887 = vpop.f32.mrb[0].mxu0
      %v888 = vadd.f32 0.0, %v887
      %v889 = vpop.f32.mrb[0].mxu0
      %v890 = vadd.f32 0.0, %v889
      %v891 = vpop.f32.mrb[0].mxu0
      %v892 = vadd.f32 0.0, %v891
      %v893 = vpop.f32.mrb[0].mxu0
      %v894 = vadd.f32 0.0, %v893
      %895 = vdwg.mxu0
      %v896 = vadd.f32 %v784, %v878
      %v897 = vadd.f32 %v785, %v880
      %v898 = vadd.f32 %v786, %v882
      %v899 = vadd.f32 %v787, %v884
      %v900 = vadd.f32 %v788, %v888
      %v901 = vadd.f32 %v789, %v890
      %v902 = vadd.f32 %v790, %v892
      %v903 = vadd.f32 %v791, %v894
      %904 = vrot.lane.b32.xlu0 %v254, 113
      %v905 = vpop.permute.xlu0 %904
      %906 = vrot.lane.b32.xlu0 %v256, 113
      %v907 = vpop.permute.xlu0 %906
      %vm908 = vcmp.lt.s32.totalorder %v263, 113
      %v909 = vsel %vm908, %v905, %v907
      %v910 = vsel %vm908, %v907, %v905
      %s911 = scalar_lea.vmem %s1, 6
      %v912 = vld [vmem:[%s911] ss:$8 sm:$0x3]
      %v914 = vlaneseq
      %v915 = vshrl.u32 %v914, 7
      %v916 = vsub.s32 0, %v915
      %v917 = vrot.slane %v912, %v916
      %v918 = vlaneseq
      %v919 = vshrl.u32 %v918, 7
      %v920 = vsub.s32 1, %v919
      %v921 = vrot.slane %v912, %v920
      %v924 = vmul.f32 %v909, %v917
      %v925 = vmul.f32 %v910, %v921
      %s926 = scalar_lea.vmem %s2, 96
      %v927 = vld [vmem:[%s926] sm:$0xf]
      %v928 = vld [vmem:[%s926 + $0x4] sm:$0xf]
      %v929 = vld [vmem:[%s926 + $0x8] sm:$0xf]
      %v930 = vld [vmem:[%s926 + $0xc] sm:$0xf]
      %v931 = vpack.c.bf16 %v924, %v924
      %v932 = vpack.c.bf16 %v925, %v925
      %v937 = vunpack.c.l.b16 %v927
      %v938 = vunpack.c.l.b16 %v928
      %v939 = vunpack.c.l.b16 %v929
      %v940 = vunpack.c.l.b16 %v930
      %v941 = vpack.c.b16 %v938, %v937
      %v942 = vpack.c.b16 %v940, %v939
      %v944 = vsel %vm326, %v941, 0
      %v947 = vsel %vm326, %v942, 0
      %v950 = vand.u32 %v931, %v336
      %v953 = vand.u32 %v932, %v336
      %955 = vmatprep.subr.bf16.mxu0 %v953
      %956 = vmatpush1.bf16.msra.mxu0 %v950
      %957 = vmatprep.subr.bf16.mxu0 0
      %958 = vmatpush1.bf16.msra.mxu0 0
      %959 = vmatprep.subr.bf16.mxu0 0
      %960 = vmatpush1.bf16.msra.mxu0 0
      %961 = vmatprep.subr.bf16.mxu0 0
      %962 = vmatpush1.bf16.msra.mxu0 0
      %963 = vmatprep.subr.bf16.mxu0 0
      %964 = vmatpush1.bf16.msra.mxu0 0
      %965 = vmatprep.subr.bf16.mxu0 0
      %966 = vmatpush1.bf16.msra.mxu0 0
      %967 = vmatprep.subr.bf16.mxu0 0
      %968 = vmatpush1.bf16.msra.mxu0 0
      %969 = vmatprep.subr.bf16.mxu0 0
      %970 = vmatpush1.bf16.msra.mxu0 0
      %971 = vmatprep.subr.bf16.mxu0 0
      %972 = vmatpush1.bf16.msra.mxu0 0
      %973 = vmatprep.subr.bf16.mxu0 0
      %974 = vmatpush1.bf16.msra.mxu0 0
      %975 = vmatprep.subr.bf16.mxu0 0
      %976 = vmatpush1.bf16.msra.mxu0 0
      %977 = vmatprep.subr.bf16.mxu0 0
      %978 = vmatpush1.bf16.msra.mxu0 0
      %979 = vmatprep.subr.bf16.mxu0 0
      %980 = vmatpush1.bf16.msra.mxu0 0
      %981 = vmatprep.subr.bf16.mxu0 0
      %982 = vmatpush1.bf16.msra.mxu0 0
      %983 = vmatprep.subr.bf16.mxu0 0
      %984 = vmatpush1.bf16.msra.mxu0 0
      %985 = vmatprep.subr.bf16.mxu0 0
      %986 = vmatpush1.bf16.msra.mxu0 0
      %987 = vmatprep.mubr.bf16.mxu0 0
      %988 = vmatmul.mubr.bf16.gmra.mrb[0].mxu0 %v944
      %v989 = vpop.f32.mrb[0].mxu0
      %v990 = vadd.f32 0.0, %v989
      %v991 = vpop.f32.mrb[0].mxu0
      %v992 = vadd.f32 0.0, %v991
      %v993 = vpop.f32.mrb[0].mxu0
      %v994 = vadd.f32 0.0, %v993
      %v995 = vpop.f32.mrb[0].mxu0
      %v996 = vadd.f32 0.0, %v995
      %997 = vmatprep.mubr.bf16.mxu0 0
      %998 = vmatmul.mubr.bf16.gmra.mrb[0].mxu0 %v947
      %v999 = vpop.f32.mrb[0].mxu0
      %v1000 = vadd.f32 0.0, %v999
      %v1001 = vpop.f32.mrb[0].mxu0
      %v1002 = vadd.f32 0.0, %v1001
      %v1003 = vpop.f32.mrb[0].mxu0
      %v1004 = vadd.f32 0.0, %v1003
      %v1005 = vpop.f32.mrb[0].mxu0
      %v1006 = vadd.f32 0.0, %v1005
      %1007 = vdwg.mxu0
      %v1008 = vadd.f32 %v896, %v990
      %v1009 = vadd.f32 %v897, %v992
      %v1010 = vadd.f32 %v898, %v994
      %v1011 = vadd.f32 %v899, %v996
      %v1012 = vadd.f32 %v900, %v1000
      %v1013 = vadd.f32 %v901, %v1002
      %v1014 = vadd.f32 %v902, %v1004
      %v1015 = vadd.f32 %v903, %v1006
      %1016 = vrot.lane.b32.xlu0 %v254, 112
      %v1017 = vpop.permute.xlu0 %1016
      %1018 = vrot.lane.b32.xlu0 %v256, 112
      %v1019 = vpop.permute.xlu0 %1018
      %vm1020 = vcmp.lt.s32.totalorder %v263, 112
      %v1021 = vsel %vm1020, %v1017, %v1019
      %v1022 = vsel %vm1020, %v1019, %v1017
      %s1023 = scalar_lea.vmem %s1, 7
      %v1024 = vld [vmem:[%s1023] ss:$8 sm:$0x3]
      %v1026 = vlaneseq
      %v1027 = vshrl.u32 %v1026, 7
      %v1028 = vsub.s32 0, %v1027
      %v1029 = vrot.slane %v1024, %v1028
      %v1030 = vlaneseq
      %v1031 = vshrl.u32 %v1030, 7
      %v1032 = vsub.s32 1, %v1031
      %v1033 = vrot.slane %v1024, %v1032
      %v1036 = vmul.f32 %v1021, %v1029
      %v1037 = vmul.f32 %v1022, %v1033
      %s1038 = scalar_lea.vmem %s2, 112
      %v1039 = vld [vmem:[%s1038] sm:$0xf]
      %v1040 = vld [vmem:[%s1038 + $0x4] sm:$0xf]
      %v1041 = vld [vmem:[%s1038 + $0x8] sm:$0xf]
      %v1042 = vld [vmem:[%s1038 + $0xc] sm:$0xf]
      %v1043 = vpack.c.bf16 %v1036, %v1036
      %v1044 = vpack.c.bf16 %v1037, %v1037
      %v1049 = vunpack.c.l.b16 %v1039
      %v1050 = vunpack.c.l.b16 %v1040
      %v1051 = vunpack.c.l.b16 %v1041
      %v1052 = vunpack.c.l.b16 %v1042
      %v1053 = vpack.c.b16 %v1050, %v1049
      %v1054 = vpack.c.b16 %v1052, %v1051
      %v1056 = vsel %vm326, %v1053, 0
      %v1059 = vsel %vm326, %v1054, 0
      %v1062 = vand.u32 %v1043, %v336
      %v1065 = vand.u32 %v1044, %v336
      %1067 = vmatprep.subr.bf16.mxu0 %v1065
      %1068 = vmatpush1.bf16.msra.mxu0 %v1062
      %1069 = vmatprep.subr.bf16.mxu0 0
      %1070 = vmatpush1.bf16.msra.mxu0 0
      %1071 = vmatprep.subr.bf16.mxu0 0
      %1072 = vmatpush1.bf16.msra.mxu0 0
      %1073 = vmatprep.subr.bf16.mxu0 0
      %1074 = vmatpush1.bf16.msra.mxu0 0
      %1075 = vmatprep.subr.bf16.mxu0 0
      %1076 = vmatpush1.bf16.msra.mxu0 0
      %1077 = vmatprep.subr.bf16.mxu0 0
      %1078 = vmatpush1.bf16.msra.mxu0 0
      %1079 = vmatprep.subr.bf16.mxu0 0
      %1080 = vmatpush1.bf16.msra.mxu0 0
      %1081 = vmatprep.subr.bf16.mxu0 0
      %1082 = vmatpush1.bf16.msra.mxu0 0
      %1083 = vmatprep.subr.bf16.mxu0 0
      %1084 = vmatpush1.bf16.msra.mxu0 0
      %1085 = vmatprep.subr.bf16.mxu0 0
      %1086 = vmatpush1.bf16.msra.mxu0 0
      %1087 = vmatprep.subr.bf16.mxu0 0
      %1088 = vmatpush1.bf16.msra.mxu0 0
      %1089 = vmatprep.subr.bf16.mxu0 0
      %1090 = vmatpush1.bf16.msra.mxu0 0
      %1091 = vmatprep.subr.bf16.mxu0 0
      %1092 = vmatpush1.bf16.msra.mxu0 0
      %1093 = vmatprep.subr.bf16.mxu0 0
      %1094 = vmatpush1.bf16.msra.mxu0 0
      %1095 = vmatprep.subr.bf16.mxu0 0
      %1096 = vmatpush1.bf16.msra.mxu0 0
      %1097 = vmatprep.subr.bf16.mxu0 0
      %1098 = vmatpush1.bf16.msra.mxu0 0
      %1099 = vmatprep.mubr.bf16.mxu0 0
      %1100 = vmatmul.mubr.bf16.gmra.mrb[0].mxu0 %v1056
      %v1101 = vpop.f32.mrb[0].mxu0
      %v1102 = vadd.f32 0.0, %v1101
      %v1103 = vpop.f32.mrb[0].mxu0
      %v1104 = vadd.f32 0.0, %v1103
      %v1105 = vpop.f32.mrb[0].mxu0
      %v1106 = vadd.f32 0.0, %v1105
      %v1107 = vpop.f32.mrb[0].mxu0
      %v1108 = vadd.f32 0.0, %v1107
      %1109 = vmatprep.mubr.bf16.mxu0 0
      %1110 = vmatmul.mubr.bf16.gmra.mrb[0].mxu0 %v1059
      %v1111 = vpop.f32.mrb[0].mxu0
      %v1112 = vadd.f32 0.0, %v1111
      %v1113 = vpop.f32.mrb[0].mxu0
      %v1114 = vadd.f32 0.0, %v1113
      %v1115 = vpop.f32.mrb[0].mxu0
      %v1116 = vadd.f32 0.0, %v1115
      %v1117 = vpop.f32.mrb[0].mxu0
      %v1118 = vadd.f32 0.0, %v1117
      %1119 = vdwg.mxu0
      %v1120 = vadd.f32 %v1008, %v1102
      %v1121 = vadd.f32 %v1009, %v1104
      %v1122 = vadd.f32 %v1010, %v1106
      %v1123 = vadd.f32 %v1011, %v1108
      %v1124 = vadd.f32 %v1012, %v1112
      %v1125 = vadd.f32 %v1013, %v1114
      %v1126 = vadd.f32 %v1014, %v1116
      %v1127 = vadd.f32 %v1015, %v1118
      %1128 = vrot.lane.b32.xlu0 %v254, 111
      %v1129 = vpop.permute.xlu0 %1128
      %1130 = vrot.lane.b32.xlu0 %v256, 111
      %v1131 = vpop.permute.xlu0 %1130
      %vm1132 = vcmp.lt.s32.totalorder %v263, 111
      %v1133 = vsel %vm1132, %v1129, %v1131
      %v1134 = vsel %vm1132, %v1131, %v1129
      %s1135 = scalar_lea.vmem %s1, 16
      %v1136 = vld [vmem:[%s1135] ss:$8 sm:$0x3]
      %v1138 = vlaneseq
      %v1139 = vshrl.u32 %v1138, 7
      %v1140 = vsub.s32 0, %v1139
      %v1141 = vrot.slane %v1136, %v1140
      %v1142 = vlaneseq
      %v1143 = vshrl.u32 %v1142, 7
      %v1144 = vsub.s32 1, %v1143
      %v1145 = vrot.slane %v1136, %v1144
      %v1148 = vmul.f32 %v1133, %v1141
      %v1149 = vmul.f32 %v1134, %v1145
      %s1150 = scalar_lea.vmem %s2, 128
      %v1151 = vld [vmem:[%s1150] sm:$0xf]
      %v1152 = vld [vmem:[%s1150 + $0x4] sm:$0xf]
      %v1153 = vld [vmem:[%s1150 + $0x8] sm:$0xf]
      %v1154 = vld [vmem:[%s1150 + $0xc] sm:$0xf]
      %v1155 = vpack.c.bf16 %v1148, %v1148
      %v1156 = vpack.c.bf16 %v1149, %v1149
      %v1161 = vunpack.c.l.b16 %v1151
      %v1162 = vunpack.c.l.b16 %v1152
      %v1163 = vunpack.c.l.b16 %v1153
      %v1164 = vunpack.c.l.b16 %v1154
      %v1165 = vpack.c.b16 %v1162, %v1161
      %v1166 = vpack.c.b16 %v1164, %v1163
      %v1168 = vsel %vm326, %v1165, 0
      %v1171 = vsel %vm326, %v1166, 0
      %v1174 = vand.u32 %v1155, %v336
      %v1177 = vand.u32 %v1156, %v336
      %1179 = vmatprep.subr.bf16.mxu0 %v1177
      %1180 = vmatpush1.bf16.msra.mxu0 %v1174
      %1181 = vmatprep.subr.bf16.mxu0 0
      %1182 = vmatpush1.bf16.msra.mxu0 0
      %1183 = vmatprep.subr.bf16.mxu0 0
      %1184 = vmatpush1.bf16.msra.mxu0 0
      %1185 = vmatprep.subr.bf16.mxu0 0
      %1186 = vmatpush1.bf16.msra.mxu0 0
      %1187 = vmatprep.subr.bf16.mxu0 0
      %1188 = vmatpush1.bf16.msra.mxu0 0
      %1189 = vmatprep.subr.bf16.mxu0 0
      %1190 = vmatpush1.bf16.msra.mxu0 0
      %1191 = vmatprep.subr.bf16.mxu0 0
      %1192 = vmatpush1.bf16.msra.mxu0 0
      %1193 = vmatprep.subr.bf16.mxu0 0
      %1194 = vmatpush1.bf16.msra.mxu0 0
      %1195 = vmatprep.subr.bf16.mxu0 0
      %1196 = vmatpush1.bf16.msra.mxu0 0
      %1197 = vmatprep.subr.bf16.mxu0 0
      %1198 = vmatpush1.bf16.msra.mxu0 0
      %1199 = vmatprep.subr.bf16.mxu0 0
      %1200 = vmatpush1.bf16.msra.mxu0 0
      %1201 = vmatprep.subr.bf16.mxu0 0
      %1202 = vmatpush1.bf16.msra.mxu0 0
      %1203 = vmatprep.subr.bf16.mxu0 0
      %1204 = vmatpush1.bf16.msra.mxu0 0
      %1205 = vmatprep.subr.bf16.mxu0 0
      %1206 = vmatpush1.bf16.msra.mxu0 0
      %1207 = vmatprep.subr.bf16.mxu0 0
      %1208 = vmatpush1.bf16.msra.mxu0 0
      %1209 = vmatprep.subr.bf16.mxu0 0
      %1210 = vmatpush1.bf16.msra.mxu0 0
      %1211 = vmatprep.mubr.bf16.mxu0 0
      %1212 = vmatmul.mubr.bf16.gmra.mrb[0].mxu0 %v1168
      %v1213 = vpop.f32.mrb[0].mxu0
      %v1214 = vadd.f32 0.0, %v1213
      %v1215 = vpop.f32.mrb[0].mxu0
      %v1216 = vadd.f32 0.0, %v1215
      %v1217 = vpop.f32.mrb[0].mxu0
      %v1218 = vadd.f32 0.0, %v1217
      %v1219 = vpop.f32.mrb[0].mxu0
      %v1220 = vadd.f32 0.0, %v1219
      %1221 = vmatprep.mubr.bf16.mxu0 0
      %1222 = vmatmul.mubr.bf16.gmra.mrb[0].mxu0 %v1171
      %v1223 = vpop.f32.mrb[0].mxu0
      %v1224 = vadd.f32 0.0, %v1223
      %v1225 = vpop.f32.mrb[0].mxu0
      %v1226 = vadd.f32 0.0, %v1225
      %v1227 = vpop.f32.mrb[0].mxu0
      %v1228 = vadd.f32 0.0, %v1227
      %v1229 = vpop.f32.mrb[0].mxu0
      %v1230 = vadd.f32 0.0, %v1229
      %1231 = vdwg.mxu0
      %v1232 = vadd.f32 %v1120, %v1214
      %v1233 = vadd.f32 %v1121, %v1216
      %v1234 = vadd.f32 %v1122, %v1218
      %v1235 = vadd.f32 %v1123, %v1220
      %v1236 = vadd.f32 %v1124, %v1224
      %v1237 = vadd.f32 %v1125, %v1226
      %v1238 = vadd.f32 %v1126, %v1228
      %v1239 = vadd.f32 %v1127, %v1230
      %v1240 = vld [vmem:[%s3] sm:$0xff]
      %v1241 = vld [vmem:[%s3 + $0x8] sm:$0xff]
      %v1242 = vld [vmem:[%s3 + $0x10] sm:$0xff]
      %v1243 = vld [vmem:[%s3 + $0x18] sm:$0xff]
      %1245 = vset.pattern.permute.xlu0 0
      %1246 = vperm.xlu0 %1245, %v1240
      %v1247 = vpop.permute.xlu0 %1246
      %1250 = vset.pattern.permute.xlu0 0
      %1251 = vperm.xlu0 %1250, %v1241
      %v1252 = vpop.permute.xlu0 %1251
      %1255 = vset.pattern.permute.xlu0 0
      %1256 = vperm.xlu0 %1255, %v1242
      %v1257 = vpop.permute.xlu0 %1256
      %1260 = vset.pattern.permute.xlu0 0
      %1261 = vperm.xlu0 %1260, %v1243
      %v1262 = vpop.permute.xlu0 %1261
      %v1264 = vadd.f32 %v1232, %v1247
      %v1265 = vadd.f32 %v1233, %v1247
      %v1266 = vadd.f32 %v1234, %v1252
      %v1267 = vadd.f32 %v1235, %v1252
      %v1268 = vadd.f32 %v1236, %v1257
      %v1269 = vadd.f32 %v1237, %v1257
      %v1270 = vadd.f32 %v1238, %v1262
      %v1271 = vadd.f32 %v1239, %v1262
      %vm1272 = vcmp.ge.f32.partialorder %v1264, 0.0
      %vm1273 = vcmp.ge.f32.partialorder %v1265, 0.0
      %vm1274 = vcmp.ge.f32.partialorder %v1266, 0.0
      %vm1275 = vcmp.ge.f32.partialorder %v1267, 0.0
      %vm1276 = vcmp.ge.f32.partialorder %v1268, 0.0
      %vm1277 = vcmp.ge.f32.partialorder %v1269, 0.0
      %vm1278 = vcmp.ge.f32.partialorder %v1270, 0.0
      %vm1279 = vcmp.ge.f32.partialorder %v1271, 0.0
      %v1280 = vmul.f32 %v1264, 0.05
      %v1281 = vmul.f32 %v1265, 0.05
      %v1282 = vmul.f32 %v1266, 0.05
      %v1283 = vmul.f32 %v1267, 0.05
      %v1284 = vmul.f32 %v1268, 0.05
      %v1285 = vmul.f32 %v1269, 0.05
      %v1286 = vmul.f32 %v1270, 0.05
      %v1287 = vmul.f32 %v1271, 0.05
      %v1288 = vsel %vm1272, %v1264, %v1280
      %v1289 = vsel %vm1273, %v1265, %v1281
      %v1290 = vsel %vm1274, %v1266, %v1282
      %v1291 = vsel %vm1275, %v1267, %v1283
      %v1292 = vsel %vm1276, %v1268, %v1284
      %v1293 = vsel %vm1277, %v1269, %v1285
      %v1294 = vsel %vm1278, %v1270, %v1286
      %v1295 = vsel %vm1279, %v1271, %v1287
      %1296 = vrot.lane.b32.xlu0 %v1288, 17
      %v1297 = vpop.permute.xlu0 %1296
      %1298 = vrot.lane.b32.xlu0 %v1290, 17
      %v1299 = vpop.permute.xlu0 %1298
      %1300 = vrot.lane.b32.xlu0 %v1292, 17
      %v1301 = vpop.permute.xlu0 %1300
      %1302 = vrot.lane.b32.xlu0 %v1294, 17
      %v1303 = vpop.permute.xlu0 %1302
      %1304 = vrot.lane.b32.xlu0 %v1289, 17
      %v1305 = vpop.permute.xlu0 %1304
      %1306 = vrot.lane.b32.xlu0 %v1291, 17
      %v1307 = vpop.permute.xlu0 %1306
      %1308 = vrot.lane.b32.xlu0 %v1293, 17
      %v1309 = vpop.permute.xlu0 %1308
      %1310 = vrot.lane.b32.xlu0 %v1295, 17
      %v1311 = vpop.permute.xlu0 %1310
      %v1312 = vsel %vm264, %v1297, %v1305
      %v1313 = vsel %vm264, %v1299, %v1307
      %v1314 = vsel %vm264, %v1301, %v1309
      %v1315 = vsel %vm264, %v1303, %v1311
      %v1316 = vsel %vm264, %v1305, %v1297
      %v1317 = vsel %vm264, %v1307, %v1299
      %v1318 = vsel %vm264, %v1309, %v1301
      %v1319 = vsel %vm264, %v1311, %v1303
      %v1320 = vmul.f32 %v1316, %v272
      %v1321 = vmul.f32 %v1312, %v276
      %v1322 = vmul.f32 %v1317, %v272
      %v1323 = vmul.f32 %v1313, %v276
      %v1324 = vmul.f32 %v1318, %v272
      %v1325 = vmul.f32 %v1314, %v276
      %v1326 = vmul.f32 %v1319, %v272
      %v1327 = vmul.f32 %v1315, %v276
      %v1328 = vld [vmem:[%s4] sm:$0xf]
      %v1329 = vld [vmem:[%s4 + $0x4] sm:$0xf]
      %v1330 = vld [vmem:[%s4 + $0x8] sm:$0xf]
      %v1331 = vld [vmem:[%s4 + $0xc] sm:$0xf]
      %v1332 = vpack.c.bf16 %v1322, %v1320
      %v1333 = vpack.c.bf16 %v1323, %v1321
      %v1334 = vpack.c.bf16 %v1326, %v1324
      %v1335 = vpack.c.bf16 %v1327, %v1325
      %1336 = vrot.lane.b32.xlu0 %v1288, 16
      %v1337 = vpop.permute.xlu0 %1336
      %1338 = vrot.lane.b32.xlu0 %v1290, 16
      %v1339 = vpop.permute.xlu0 %1338
      %1340 = vrot.lane.b32.xlu0 %v1292, 16
      %v1341 = vpop.permute.xlu0 %1340
      %1342 = vrot.lane.b32.xlu0 %v1294, 16
      %v1343 = vpop.permute.xlu0 %1342
      %1344 = vrot.lane.b32.xlu0 %v1289, 16
      %v1345 = vpop.permute.xlu0 %1344
      %1346 = vrot.lane.b32.xlu0 %v1291, 16
      %v1347 = vpop.permute.xlu0 %1346
      %1348 = vrot.lane.b32.xlu0 %v1293, 16
      %v1349 = vpop.permute.xlu0 %1348
      %1350 = vrot.lane.b32.xlu0 %v1295, 16
      %v1351 = vpop.permute.xlu0 %1350
      %v1352 = vsel %vm291, %v1337, %v1345
      %v1353 = vsel %vm291, %v1339, %v1347
      %v1354 = vsel %vm291, %v1341, %v1349
      %v1355 = vsel %vm291, %v1343, %v1351
      %v1356 = vsel %vm291, %v1345, %v1337
      %v1357 = vsel %vm291, %v1347, %v1339
      %v1358 = vsel %vm291, %v1349, %v1341
      %v1359 = vsel %vm291, %v1351, %v1343
      %v1360 = vmul.f32 %v1356, %v300
      %v1361 = vmul.f32 %v1352, %v304
      %v1362 = vmul.f32 %v1357, %v300
      %v1363 = vmul.f32 %v1353, %v304
      %v1364 = vmul.f32 %v1358, %v300
      %v1365 = vmul.f32 %v1354, %v304
      %v1366 = vmul.f32 %v1359, %v300
      %v1367 = vmul.f32 %v1355, %v304
      %s1368 = scalar_lea.vmem %s4, 16
      %v1369 = vld [vmem:[%s1368] sm:$0xf]
      %v1370 = vld [vmem:[%s1368 + $0x4] sm:$0xf]
      %v1371 = vld [vmem:[%s1368 + $0x8] sm:$0xf]
      %v1372 = vld [vmem:[%s1368 + $0xc] sm:$0xf]
      %v1373 = vpack.c.bf16 %v1362, %v1360
      %v1374 = vpack.c.bf16 %v1363, %v1361
      %v1375 = vpack.c.bf16 %v1366, %v1364
      %v1376 = vpack.c.bf16 %v1367, %v1365
      %v1381 = vunpack.c.l.b16 %v1369
      %v1382 = vunpack.c.l.b16 %v1370
      %v1383 = vunpack.c.l.b16 %v1371
      %v1384 = vunpack.c.l.b16 %v1372
      %v1385 = vpack.c.b16 %v1382, %v1381
      %v1386 = vpack.c.b16 %v1384, %v1383
      %vm1387 = vcmask 261120
      %v1389 = vsel %vm1387, %v1385, 0
      %v1392 = vsel %vm1387, %v1386, 0
      %1394 = vmatprep.subr.bf16.mxu0 %v1374
      %1395 = vmatpush1.bf16.msra.mxu0 %v1373
      %1396 = vmatprep.subr.bf16.mxu0 %v1376
      %1397 = vmatpush1.bf16.msra.mxu0 %v1375
      %1398 = vmatprep.subr.bf16.mxu0 0
      %1399 = vmatpush1.bf16.msra.mxu0 0
      %1400 = vmatprep.subr.bf16.mxu0 0
      %1401 = vmatpush1.bf16.msra.mxu0 0
      %1402 = vmatprep.subr.bf16.mxu0 0
      %1403 = vmatpush1.bf16.msra.mxu0 0
      %1404 = vmatprep.subr.bf16.mxu0 0
      %1405 = vmatpush1.bf16.msra.mxu0 0
      %1406 = vmatprep.subr.bf16.mxu0 0
      %1407 = vmatpush1.bf16.msra.mxu0 0
      %1408 = vmatprep.subr.bf16.mxu0 0
      %1409 = vmatpush1.bf16.msra.mxu0 0
      %1410 = vmatprep.subr.bf16.mxu0 0
      %1411 = vmatpush1.bf16.msra.mxu0 0
      %1412 = vmatprep.subr.bf16.mxu0 0
      %1413 = vmatpush1.bf16.msra.mxu0 0
      %1414 = vmatprep.subr.bf16.mxu0 0
      %1415 = vmatpush1.bf16.msra.mxu0 0
      %1416 = vmatprep.subr.bf16.mxu0 0
      %1417 = vmatpush1.bf16.msra.mxu0 0
      %1418 = vmatprep.subr.bf16.mxu0 0
      %1419 = vmatpush1.bf16.msra.mxu0 0
      %1420 = vmatprep.subr.bf16.mxu0 0
      %1421 = vmatpush1.bf16.msra.mxu0 0
      %1422 = vmatprep.subr.bf16.mxu0 0
      %1423 = vmatpush1.bf16.msra.mxu0 0
      %1424 = vmatprep.subr.bf16.mxu0 0
      %1425 = vmatpush1.bf16.msra.mxu0 0
      %1426 = vmatprep.mubr.bf16.mxu0 0
      %1427 = vmatmul.mubr.bf16.gmra.mrb[0].mxu0 %v1389
      %v1428 = vpop.f32.mrb[0].mxu0
      %v1429 = vadd.f32 0.0, %v1428
      %v1430 = vpop.f32.mrb[0].mxu0
      %v1431 = vadd.f32 0.0, %v1430
      %v1432 = vpop.f32.mrb[0].mxu0
      %v1433 = vadd.f32 0.0, %v1432
      %v1434 = vpop.f32.mrb[0].mxu0
      %v1435 = vadd.f32 0.0, %v1434
      %1436 = vmatprep.mubr.bf16.mxu0 0
      %1437 = vmatmul.mubr.bf16.gmra.mrb[0].mxu0 %v1392
      %v1438 = vpop.f32.mrb[0].mxu0
      %v1439 = vadd.f32 0.0, %v1438
      %v1440 = vpop.f32.mrb[0].mxu0
      %v1441 = vadd.f32 0.0, %v1440
      %v1442 = vpop.f32.mrb[0].mxu0
      %v1443 = vadd.f32 0.0, %v1442
      %v1444 = vpop.f32.mrb[0].mxu0
      %v1445 = vadd.f32 0.0, %v1444
      %1446 = vdwg.mxu0
      %v1451 = vunpack.c.l.b16 %v1328
      %v1452 = vunpack.c.l.b16 %v1329
      %v1453 = vunpack.c.l.b16 %v1330
      %v1454 = vunpack.c.l.b16 %v1331
      %v1455 = vpack.c.b16 %v1452, %v1451
      %v1456 = vpack.c.b16 %v1454, %v1453
      %v1458 = vsel %vm1387, %v1455, 0
      %v1461 = vsel %vm1387, %v1456, 0
      %1463 = vmatprep.subr.bf16.mxu0 %v1333
      %1464 = vmatpush1.bf16.msra.mxu0 %v1332
      %1465 = vmatprep.subr.bf16.mxu0 %v1335
      %1466 = vmatpush1.bf16.msra.mxu0 %v1334
      %1467 = vmatprep.subr.bf16.mxu0 0
      %1468 = vmatpush1.bf16.msra.mxu0 0
      %1469 = vmatprep.subr.bf16.mxu0 0
      %1470 = vmatpush1.bf16.msra.mxu0 0
      %1471 = vmatprep.subr.bf16.mxu0 0
      %1472 = vmatpush1.bf16.msra.mxu0 0
      %1473 = vmatprep.subr.bf16.mxu0 0
      %1474 = vmatpush1.bf16.msra.mxu0 0
      %1475 = vmatprep.subr.bf16.mxu0 0
      %1476 = vmatpush1.bf16.msra.mxu0 0
      %1477 = vmatprep.subr.bf16.mxu0 0
      %1478 = vmatpush1.bf16.msra.mxu0 0
      %1479 = vmatprep.subr.bf16.mxu0 0
      %1480 = vmatpush1.bf16.msra.mxu0 0
      %1481 = vmatprep.subr.bf16.mxu0 0
      %1482 = vmatpush1.bf16.msra.mxu0 0
      %1483 = vmatprep.subr.bf16.mxu0 0
      %1484 = vmatpush1.bf16.msra.mxu0 0
      %1485 = vmatprep.subr.bf16.mxu0 0
      %1486 = vmatpush1.bf16.msra.mxu0 0
      %1487 = vmatprep.subr.bf16.mxu0 0
      %1488 = vmatpush1.bf16.msra.mxu0 0
      %1489 = vmatprep.subr.bf16.mxu0 0
      %1490 = vmatpush1.bf16.msra.mxu0 0
      %1491 = vmatprep.subr.bf16.mxu0 0
      %1492 = vmatpush1.bf16.msra.mxu0 0
      %1493 = vmatprep.subr.bf16.mxu0 0
      %1494 = vmatpush1.bf16.msra.mxu0 0
      %1495 = vmatprep.mubr.bf16.mxu0 0
      %1496 = vmatmul.mubr.bf16.gmra.mrb[0].mxu0 %v1458
      %v1497 = vpop.f32.mrb[0].mxu0
      %v1498 = vadd.f32 %v1429, %v1497
      %v1499 = vpop.f32.mrb[0].mxu0
      %v1500 = vadd.f32 %v1431, %v1499
      %v1501 = vpop.f32.mrb[0].mxu0
      %v1502 = vadd.f32 %v1433, %v1501
      %v1503 = vpop.f32.mrb[0].mxu0
      %v1504 = vadd.f32 %v1435, %v1503
      %1505 = vmatprep.mubr.bf16.mxu0 0
      %1506 = vmatmul.mubr.bf16.gmra.mrb[0].mxu0 %v1461
      %v1507 = vpop.f32.mrb[0].mxu0
      %v1508 = vadd.f32 %v1439, %v1507
      %v1509 = vpop.f32.mrb[0].mxu0
      %v1510 = vadd.f32 %v1441, %v1509
      %v1511 = vpop.f32.mrb[0].mxu0
      %v1512 = vadd.f32 %v1443, %v1511
      %v1513 = vpop.f32.mrb[0].mxu0
      %v1514 = vadd.f32 %v1445, %v1513
      %1515 = vdwg.mxu0
      %1516 = vrot.lane.b32.xlu0 %v1288, 15
      %v1517 = vpop.permute.xlu0 %1516
      %1518 = vrot.lane.b32.xlu0 %v1290, 15
      %v1519 = vpop.permute.xlu0 %1518
      %1520 = vrot.lane.b32.xlu0 %v1292, 15
      %v1521 = vpop.permute.xlu0 %1520
      %1522 = vrot.lane.b32.xlu0 %v1294, 15
      %v1523 = vpop.permute.xlu0 %1522
      %1524 = vrot.lane.b32.xlu0 %v1289, 15
      %v1525 = vpop.permute.xlu0 %1524
      %1526 = vrot.lane.b32.xlu0 %v1291, 15
      %v1527 = vpop.permute.xlu0 %1526
      %1528 = vrot.lane.b32.xlu0 %v1293, 15
      %v1529 = vpop.permute.xlu0 %1528
      %1530 = vrot.lane.b32.xlu0 %v1295, 15
      %v1531 = vpop.permute.xlu0 %1530
      %v1532 = vsel %vm475, %v1517, %v1525
      %v1533 = vsel %vm475, %v1519, %v1527
      %v1534 = vsel %vm475, %v1521, %v1529
      %v1535 = vsel %vm475, %v1523, %v1531
      %v1536 = vsel %vm475, %v1525, %v1517
      %v1537 = vsel %vm475, %v1527, %v1519
      %v1538 = vsel %vm475, %v1529, %v1521
      %v1539 = vsel %vm475, %v1531, %v1523
      %v1540 = vmul.f32 %v1536, %v484
      %v1541 = vmul.f32 %v1532, %v488
      %v1542 = vmul.f32 %v1537, %v484
      %v1543 = vmul.f32 %v1533, %v488
      %v1544 = vmul.f32 %v1538, %v484
      %v1545 = vmul.f32 %v1534, %v488
      %v1546 = vmul.f32 %v1539, %v484
      %v1547 = vmul.f32 %v1535, %v488
      %s1548 = scalar_lea.vmem %s4, 32
      %v1549 = vld [vmem:[%s1548] sm:$0xf]
      %v1550 = vld [vmem:[%s1548 + $0x4] sm:$0xf]
      %v1551 = vld [vmem:[%s1548 + $0x8] sm:$0xf]
      %v1552 = vld [vmem:[%s1548 + $0xc] sm:$0xf]
      %v1553 = vpack.c.bf16 %v1542, %v1540
      %v1554 = vpack.c.bf16 %v1543, %v1541
      %v1555 = vpack.c.bf16 %v1546, %v1544
      %v1556 = vpack.c.bf16 %v1547, %v1545
      %v1561 = vunpack.c.l.b16 %v1549
      %v1562 = vunpack.c.l.b16 %v1550
      %v1563 = vunpack.c.l.b16 %v1551
      %v1564 = vunpack.c.l.b16 %v1552
      %v1565 = vpack.c.b16 %v1562, %v1561
      %v1566 = vpack.c.b16 %v1564, %v1563
      %v1568 = vsel %vm1387, %v1565, 0
      %v1571 = vsel %vm1387, %v1566, 0
      %1573 = vmatprep.subr.bf16.mxu0 %v1554
      %1574 = vmatpush1.bf16.msra.mxu0 %v1553
      %1575 = vmatprep.subr.bf16.mxu0 %v1556
      %1576 = vmatpush1.bf16.msra.mxu0 %v1555
      %1577 = vmatprep.subr.bf16.mxu0 0
      %1578 = vmatpush1.bf16.msra.mxu0 0
      %1579 = vmatprep.subr.bf16.mxu0 0
      %1580 = vmatpush1.bf16.msra.mxu0 0
      %1581 = vmatprep.subr.bf16.mxu0 0
      %1582 = vmatpush1.bf16.msra.mxu0 0
      %1583 = vmatprep.subr.bf16.mxu0 0
      %1584 = vmatpush1.bf16.msra.mxu0 0
      %1585 = vmatprep.subr.bf16.mxu0 0
      %1586 = vmatpush1.bf16.msra.mxu0 0
      %1587 = vmatprep.subr.bf16.mxu0 0
      %1588 = vmatpush1.bf16.msra.mxu0 0
      %1589 = vmatprep.subr.bf16.mxu0 0
      %1590 = vmatpush1.bf16.msra.mxu0 0
      %1591 = vmatprep.subr.bf16.mxu0 0
      %1592 = vmatpush1.bf16.msra.mxu0 0
      %1593 = vmatprep.subr.bf16.mxu0 0
      %1594 = vmatpush1.bf16.msra.mxu0 0
      %1595 = vmatprep.subr.bf16.mxu0 0
      %1596 = vmatpush1.bf16.msra.mxu0 0
      %1597 = vmatprep.subr.bf16.mxu0 0
      %1598 = vmatpush1.bf16.msra.mxu0 0
      %1599 = vmatprep.subr.bf16.mxu0 0
      %1600 = vmatpush1.bf16.msra.mxu0 0
      %1601 = vmatprep.subr.bf16.mxu0 0
      %1602 = vmatpush1.bf16.msra.mxu0 0
      %1603 = vmatprep.subr.bf16.mxu0 0
      %1604 = vmatpush1.bf16.msra.mxu0 0
      %1605 = vmatprep.mubr.bf16.mxu0 0
      %1606 = vmatmul.mubr.bf16.gmra.mrb[0].mxu0 %v1568
      %v1607 = vpop.f32.mrb[0].mxu0
      %v1608 = vadd.f32 0.0, %v1607
      %v1609 = vpop.f32.mrb[0].mxu0
      %v1610 = vadd.f32 0.0, %v1609
      %v1611 = vpop.f32.mrb[0].mxu0
      %v1612 = vadd.f32 0.0, %v1611
      %v1613 = vpop.f32.mrb[0].mxu0
      %v1614 = vadd.f32 0.0, %v1613
      %1615 = vmatprep.mubr.bf16.mxu0 0
      %1616 = vmatmul.mubr.bf16.gmra.mrb[0].mxu0 %v1571
      %v1617 = vpop.f32.mrb[0].mxu0
      %v1618 = vadd.f32 0.0, %v1617
      %v1619 = vpop.f32.mrb[0].mxu0
      %v1620 = vadd.f32 0.0, %v1619
      %v1621 = vpop.f32.mrb[0].mxu0
      %v1622 = vadd.f32 0.0, %v1621
      %v1623 = vpop.f32.mrb[0].mxu0
      %v1624 = vadd.f32 0.0, %v1623
      %1625 = vdwg.mxu0
      %v1626 = vadd.f32 %v1498, %v1608
      %v1627 = vadd.f32 %v1500, %v1610
      %v1628 = vadd.f32 %v1502, %v1612
      %v1629 = vadd.f32 %v1504, %v1614
      %v1630 = vadd.f32 %v1508, %v1618
      %v1631 = vadd.f32 %v1510, %v1620
      %v1632 = vadd.f32 %v1512, %v1622
      %v1633 = vadd.f32 %v1514, %v1624
      %1634 = vrot.lane.b32.xlu0 %v1288, 1
      %v1635 = vpop.permute.xlu0 %1634
      %1636 = vrot.lane.b32.xlu0 %v1290, 1
      %v1637 = vpop.permute.xlu0 %1636
      %1638 = vrot.lane.b32.xlu0 %v1292, 1
      %v1639 = vpop.permute.xlu0 %1638
      %1640 = vrot.lane.b32.xlu0 %v1294, 1
      %v1641 = vpop.permute.xlu0 %1640
      %1642 = vrot.lane.b32.xlu0 %v1289, 1
      %v1643 = vpop.permute.xlu0 %1642
      %1644 = vrot.lane.b32.xlu0 %v1291, 1
      %v1645 = vpop.permute.xlu0 %1644
      %1646 = vrot.lane.b32.xlu0 %v1293, 1
      %v1647 = vpop.permute.xlu0 %1646
      %1648 = vrot.lane.b32.xlu0 %v1295, 1
      %v1649 = vpop.permute.xlu0 %1648
      %v1650 = vsel %vm587, %v1635, %v1643
      %v1651 = vsel %vm587, %v1637, %v1645
      %v1652 = vsel %vm587, %v1639, %v1647
      %v1653 = vsel %vm587, %v1641, %v1649
      %v1654 = vsel %vm587, %v1643, %v1635
      %v1655 = vsel %vm587, %v1645, %v1637
      %v1656 = vsel %vm587, %v1647, %v1639
      %v1657 = vsel %vm587, %v1649, %v1641
      %v1658 = vmul.f32 %v1654, %v596
      %v1659 = vmul.f32 %v1650, %v600
      %v1660 = vmul.f32 %v1655, %v596
      %v1661 = vmul.f32 %v1651, %v600
      %v1662 = vmul.f32 %v1656, %v596
      %v1663 = vmul.f32 %v1652, %v600
      %v1664 = vmul.f32 %v1657, %v596
      %v1665 = vmul.f32 %v1653, %v600
      %s1666 = scalar_lea.vmem %s4, 48
      %v1667 = vld [vmem:[%s1666] sm:$0xf]
      %v1668 = vld [vmem:[%s1666 + $0x4] sm:$0xf]
      %v1669 = vld [vmem:[%s1666 + $0x8] sm:$0xf]
      %v1670 = vld [vmem:[%s1666 + $0xc] sm:$0xf]
      %v1671 = vpack.c.bf16 %v1660, %v1658
      %v1672 = vpack.c.bf16 %v1661, %v1659
      %v1673 = vpack.c.bf16 %v1664, %v1662
      %v1674 = vpack.c.bf16 %v1665, %v1663
      %v1679 = vunpack.c.l.b16 %v1667
      %v1680 = vunpack.c.l.b16 %v1668
      %v1681 = vunpack.c.l.b16 %v1669
      %v1682 = vunpack.c.l.b16 %v1670
      %v1683 = vpack.c.b16 %v1680, %v1679
      %v1684 = vpack.c.b16 %v1682, %v1681
      %v1686 = vsel %vm1387, %v1683, 0
      %v1689 = vsel %vm1387, %v1684, 0
      %1691 = vmatprep.subr.bf16.mxu0 %v1672
      %1692 = vmatpush1.bf16.msra.mxu0 %v1671
      %1693 = vmatprep.subr.bf16.mxu0 %v1674
      %1694 = vmatpush1.bf16.msra.mxu0 %v1673
      %1695 = vmatprep.subr.bf16.mxu0 0
      %1696 = vmatpush1.bf16.msra.mxu0 0
      %1697 = vmatprep.subr.bf16.mxu0 0
      %1698 = vmatpush1.bf16.msra.mxu0 0
      %1699 = vmatprep.subr.bf16.mxu0 0
      %1700 = vmatpush1.bf16.msra.mxu0 0
      %1701 = vmatprep.subr.bf16.mxu0 0
      %1702 = vmatpush1.bf16.msra.mxu0 0
      %1703 = vmatprep.subr.bf16.mxu0 0
      %1704 = vmatpush1.bf16.msra.mxu0 0
      %1705 = vmatprep.subr.bf16.mxu0 0
      %1706 = vmatpush1.bf16.msra.mxu0 0
      %1707 = vmatprep.subr.bf16.mxu0 0
      %1708 = vmatpush1.bf16.msra.mxu0 0
      %1709 = vmatprep.subr.bf16.mxu0 0
      %1710 = vmatpush1.bf16.msra.mxu0 0
      %1711 = vmatprep.subr.bf16.mxu0 0
      %1712 = vmatpush1.bf16.msra.mxu0 0
      %1713 = vmatprep.subr.bf16.mxu0 0
      %1714 = vmatpush1.bf16.msra.mxu0 0
      %1715 = vmatprep.subr.bf16.mxu0 0
      %1716 = vmatpush1.bf16.msra.mxu0 0
      %1717 = vmatprep.subr.bf16.mxu0 0
      %1718 = vmatpush1.bf16.msra.mxu0 0
      %1719 = vmatprep.subr.bf16.mxu0 0
      %1720 = vmatpush1.bf16.msra.mxu0 0
      %1721 = vmatprep.subr.bf16.mxu0 0
      %1722 = vmatpush1.bf16.msra.mxu0 0
      %1723 = vmatprep.mubr.bf16.mxu0 0
      %1724 = vmatmul.mubr.bf16.gmra.mrb[0].mxu0 %v1686
      %v1725 = vpop.f32.mrb[0].mxu0
      %v1726 = vadd.f32 0.0, %v1725
      %v1727 = vpop.f32.mrb[0].mxu0
      %v1728 = vadd.f32 0.0, %v1727
      %v1729 = vpop.f32.mrb[0].mxu0
      %v1730 = vadd.f32 0.0, %v1729
      %v1731 = vpop.f32.mrb[0].mxu0
      %v1732 = vadd.f32 0.0, %v1731
      %1733 = vmatprep.mubr.bf16.mxu0 0
      %1734 = vmatmul.mubr.bf16.gmra.mrb[0].mxu0 %v1689
      %v1735 = vpop.f32.mrb[0].mxu0
      %v1736 = vadd.f32 0.0, %v1735
      %v1737 = vpop.f32.mrb[0].mxu0
      %v1738 = vadd.f32 0.0, %v1737
      %v1739 = vpop.f32.mrb[0].mxu0
      %v1740 = vadd.f32 0.0, %v1739
      %v1741 = vpop.f32.mrb[0].mxu0
      %v1742 = vadd.f32 0.0, %v1741
      %1743 = vdwg.mxu0
      %v1744 = vadd.f32 %v1626, %v1726
      %v1745 = vadd.f32 %v1627, %v1728
      %v1746 = vadd.f32 %v1628, %v1730
      %v1747 = vadd.f32 %v1629, %v1732
      %v1748 = vadd.f32 %v1630, %v1736
      %v1749 = vadd.f32 %v1631, %v1738
      %v1750 = vadd.f32 %v1632, %v1740
      %v1751 = vadd.f32 %v1633, %v1742
      %s1752 = scalar_lea.vmem %s4, 64
      %v1753 = vld [vmem:[%s1752] sm:$0xf]
      %v1754 = vld [vmem:[%s1752 + $0x4] sm:$0xf]
      %v1755 = vld [vmem:[%s1752 + $0x8] sm:$0xf]
      %v1756 = vld [vmem:[%s1752 + $0xc] sm:$0xf]
      %v1757 = vpack.c.bf16 %v1290, %v1288
      %v1758 = vpack.c.bf16 %v1291, %v1289
      %v1759 = vpack.c.bf16 %v1294, %v1292
      %v1760 = vpack.c.bf16 %v1295, %v1293
      %v1765 = vunpack.c.l.b16 %v1753
      %v1766 = vunpack.c.l.b16 %v1754
      %v1767 = vunpack.c.l.b16 %v1755
      %v1768 = vunpack.c.l.b16 %v1756
      %v1769 = vpack.c.b16 %v1766, %v1765
      %v1770 = vpack.c.b16 %v1768, %v1767
      %v1772 = vsel %vm1387, %v1769, 0
      %v1775 = vsel %vm1387, %v1770, 0
      %1777 = vmatprep.subr.bf16.mxu0 %v1758
      %1778 = vmatpush1.bf16.msra.mxu0 %v1757
      %1779 = vmatprep.subr.bf16.mxu0 %v1760
      %1780 = vmatpush1.bf16.msra.mxu0 %v1759
      %1781 = vmatprep.subr.bf16.mxu0 0
      %1782 = vmatpush1.bf16.msra.mxu0 0
      %1783 = vmatprep.subr.bf16.mxu0 0
      %1784 = vmatpush1.bf16.msra.mxu0 0
      %1785 = vmatprep.subr.bf16.mxu0 0
      %1786 = vmatpush1.bf16.msra.mxu0 0
      %1787 = vmatprep.subr.bf16.mxu0 0
      %1788 = vmatpush1.bf16.msra.mxu0 0
      %1789 = vmatprep.subr.bf16.mxu0 0
      %1790 = vmatpush1.bf16.msra.mxu0 0
      %1791 = vmatprep.subr.bf16.mxu0 0
      %1792 = vmatpush1.bf16.msra.mxu0 0
      %1793 = vmatprep.subr.bf16.mxu0 0
      %1794 = vmatpush1.bf16.msra.mxu0 0
      %1795 = vmatprep.subr.bf16.mxu0 0
      %1796 = vmatpush1.bf16.msra.mxu0 0
      %1797 = vmatprep.subr.bf16.mxu0 0
      %1798 = vmatpush1.bf16.msra.mxu0 0
      %1799 = vmatprep.subr.bf16.mxu0 0
      %1800 = vmatpush1.bf16.msra.mxu0 0
      %1801 = vmatprep.subr.bf16.mxu0 0
      %1802 = vmatpush1.bf16.msra.mxu0 0
      %1803 = vmatprep.subr.bf16.mxu0 0
      %1804 = vmatpush1.bf16.msra.mxu0 0
      %1805 = vmatprep.subr.bf16.mxu0 0
      %1806 = vmatpush1.bf16.msra.mxu0 0
      %1807 = vmatprep.subr.bf16.mxu0 0
      %1808 = vmatpush1.bf16.msra.mxu0 0
      %1809 = vmatprep.mubr.bf16.mxu0 0
      %1810 = vmatmul.mubr.bf16.gmra.mrb[0].mxu0 %v1772
      %v1811 = vpop.f32.mrb[0].mxu0
      %v1812 = vadd.f32 0.0, %v1811
      %v1813 = vpop.f32.mrb[0].mxu0
      %v1814 = vadd.f32 0.0, %v1813
      %v1815 = vpop.f32.mrb[0].mxu0
      %v1816 = vadd.f32 0.0, %v1815
      %v1817 = vpop.f32.mrb[0].mxu0
      %v1818 = vadd.f32 0.0, %v1817
      %1819 = vmatprep.mubr.bf16.mxu0 0
      %1820 = vmatmul.mubr.bf16.gmra.mrb[0].mxu0 %v1775
      %v1821 = vpop.f32.mrb[0].mxu0
      %v1822 = vadd.f32 0.0, %v1821
      %v1823 = vpop.f32.mrb[0].mxu0
      %v1824 = vadd.f32 0.0, %v1823
      %v1825 = vpop.f32.mrb[0].mxu0
      %v1826 = vadd.f32 0.0, %v1825
      %v1827 = vpop.f32.mrb[0].mxu0
      %v1828 = vadd.f32 0.0, %v1827
      %1829 = vdwg.mxu0
      %v1830 = vadd.f32 %v1744, %v1812
      %v1831 = vadd.f32 %v1745, %v1814
      %v1832 = vadd.f32 %v1746, %v1816
      %v1833 = vadd.f32 %v1747, %v1818
      %v1834 = vadd.f32 %v1748, %v1822
      %v1835 = vadd.f32 %v1749, %v1824
      %v1836 = vadd.f32 %v1750, %v1826
      %v1837 = vadd.f32 %v1751, %v1828
      %1838 = vrot.lane.b32.xlu0 %v1288, 127
      %v1839 = vpop.permute.xlu0 %1838
      %1840 = vrot.lane.b32.xlu0 %v1290, 127
      %v1841 = vpop.permute.xlu0 %1840
      %1842 = vrot.lane.b32.xlu0 %v1292, 127
      %v1843 = vpop.permute.xlu0 %1842
      %1844 = vrot.lane.b32.xlu0 %v1294, 127
      %v1845 = vpop.permute.xlu0 %1844
      %1846 = vrot.lane.b32.xlu0 %v1289, 127
      %v1847 = vpop.permute.xlu0 %1846
      %1848 = vrot.lane.b32.xlu0 %v1291, 127
      %v1849 = vpop.permute.xlu0 %1848
      %1850 = vrot.lane.b32.xlu0 %v1293, 127
      %v1851 = vpop.permute.xlu0 %1850
      %1852 = vrot.lane.b32.xlu0 %v1295, 127
      %v1853 = vpop.permute.xlu0 %1852
      %v1854 = vsel %vm796, %v1839, %v1847
      %v1855 = vsel %vm796, %v1841, %v1849
      %v1856 = vsel %vm796, %v1843, %v1851
      %v1857 = vsel %vm796, %v1845, %v1853
      %v1858 = vsel %vm796, %v1847, %v1839
      %v1859 = vsel %vm796, %v1849, %v1841
      %v1860 = vsel %vm796, %v1851, %v1843
      %v1861 = vsel %vm796, %v1853, %v1845
      %v1862 = vmul.f32 %v1854, %v805
      %v1863 = vmul.f32 %v1858, %v809
      %v1864 = vmul.f32 %v1855, %v805
      %v1865 = vmul.f32 %v1859, %v809
      %v1866 = vmul.f32 %v1856, %v805
      %v1867 = vmul.f32 %v1860, %v809
      %v1868 = vmul.f32 %v1857, %v805
      %v1869 = vmul.f32 %v1861, %v809
      %s1870 = scalar_lea.vmem %s4, 80
      %v1871 = vld [vmem:[%s1870] sm:$0xf]
      %v1872 = vld [vmem:[%s1870 + $0x4] sm:$0xf]
      %v1873 = vld [vmem:[%s1870 + $0x8] sm:$0xf]
      %v1874 = vld [vmem:[%s1870 + $0xc] sm:$0xf]
      %v1875 = vpack.c.bf16 %v1864, %v1862
      %v1876 = vpack.c.bf16 %v1865, %v1863
      %v1877 = vpack.c.bf16 %v1868, %v1866
      %v1878 = vpack.c.bf16 %v1869, %v1867
      %v1883 = vunpack.c.l.b16 %v1871
      %v1884 = vunpack.c.l.b16 %v1872
      %v1885 = vunpack.c.l.b16 %v1873
      %v1886 = vunpack.c.l.b16 %v1874
      %v1887 = vpack.c.b16 %v1884, %v1883
      %v1888 = vpack.c.b16 %v1886, %v1885
      %v1890 = vsel %vm1387, %v1887, 0
      %v1893 = vsel %vm1387, %v1888, 0
      %1895 = vmatprep.subr.bf16.mxu0 %v1876
      %1896 = vmatpush1.bf16.msra.mxu0 %v1875
      %1897 = vmatprep.subr.bf16.mxu0 %v1878
      %1898 = vmatpush1.bf16.msra.mxu0 %v1877
      %1899 = vmatprep.subr.bf16.mxu0 0
      %1900 = vmatpush1.bf16.msra.mxu0 0
      %1901 = vmatprep.subr.bf16.mxu0 0
      %1902 = vmatpush1.bf16.msra.mxu0 0
      %1903 = vmatprep.subr.bf16.mxu0 0
      %1904 = vmatpush1.bf16.msra.mxu0 0
      %1905 = vmatprep.subr.bf16.mxu0 0
      %1906 = vmatpush1.bf16.msra.mxu0 0
      %1907 = vmatprep.subr.bf16.mxu0 0
      %1908 = vmatpush1.bf16.msra.mxu0 0
      %1909 = vmatprep.subr.bf16.mxu0 0
      %1910 = vmatpush1.bf16.msra.mxu0 0
      %1911 = vmatprep.subr.bf16.mxu0 0
      %1912 = vmatpush1.bf16.msra.mxu0 0
      %1913 = vmatprep.subr.bf16.mxu0 0
      %1914 = vmatpush1.bf16.msra.mxu0 0
      %1915 = vmatprep.subr.bf16.mxu0 0
      %1916 = vmatpush1.bf16.msra.mxu0 0
      %1917 = vmatprep.subr.bf16.mxu0 0
      %1918 = vmatpush1.bf16.msra.mxu0 0
      %1919 = vmatprep.subr.bf16.mxu0 0
      %1920 = vmatpush1.bf16.msra.mxu0 0
      %1921 = vmatprep.subr.bf16.mxu0 0
      %1922 = vmatpush1.bf16.msra.mxu0 0
      %1923 = vmatprep.subr.bf16.mxu0 0
      %1924 = vmatpush1.bf16.msra.mxu0 0
      %1925 = vmatprep.subr.bf16.mxu0 0
      %1926 = vmatpush1.bf16.msra.mxu0 0
      %1927 = vmatprep.mubr.bf16.mxu0 0
      %1928 = vmatmul.mubr.bf16.gmra.mrb[0].mxu0 %v1890
      %v1929 = vpop.f32.mrb[0].mxu0
      %v1930 = vadd.f32 0.0, %v1929
      %v1931 = vpop.f32.mrb[0].mxu0
      %v1932 = vadd.f32 0.0, %v1931
      %v1933 = vpop.f32.mrb[0].mxu0
      %v1934 = vadd.f32 0.0, %v1933
      %v1935 = vpop.f32.mrb[0].mxu0
      %v1936 = vadd.f32 0.0, %v1935
      %1937 = vmatprep.mubr.bf16.mxu0 0
      %1938 = vmatmul.mubr.bf16.gmra.mrb[0].mxu0 %v1893
      %v1939 = vpop.f32.mrb[0].mxu0
      %v1940 = vadd.f32 0.0, %v1939
      %v1941 = vpop.f32.mrb[0].mxu0
      %v1942 = vadd.f32 0.0, %v1941
      %v1943 = vpop.f32.mrb[0].mxu0
      %v1944 = vadd.f32 0.0, %v1943
      %v1945 = vpop.f32.mrb[0].mxu0
      %v1946 = vadd.f32 0.0, %v1945
      %1947 = vdwg.mxu0
      %v1948 = vadd.f32 %v1830, %v1930
      %v1949 = vadd.f32 %v1831, %v1932
      %v1950 = vadd.f32 %v1832, %v1934
      %v1951 = vadd.f32 %v1833, %v1936
      %v1952 = vadd.f32 %v1834, %v1940
      %v1953 = vadd.f32 %v1835, %v1942
      %v1954 = vadd.f32 %v1836, %v1944
      %v1955 = vadd.f32 %v1837, %v1946
      %1956 = vrot.lane.b32.xlu0 %v1288, 113
      %v1957 = vpop.permute.xlu0 %1956
      %1958 = vrot.lane.b32.xlu0 %v1290, 113
      %v1959 = vpop.permute.xlu0 %1958
      %1960 = vrot.lane.b32.xlu0 %v1292, 113
      %v1961 = vpop.permute.xlu0 %1960
      %1962 = vrot.lane.b32.xlu0 %v1294, 113
      %v1963 = vpop.permute.xlu0 %1962
      %1964 = vrot.lane.b32.xlu0 %v1289, 113
      %v1965 = vpop.permute.xlu0 %1964
      %1966 = vrot.lane.b32.xlu0 %v1291, 113
      %v1967 = vpop.permute.xlu0 %1966
      %1968 = vrot.lane.b32.xlu0 %v1293, 113
      %v1969 = vpop.permute.xlu0 %1968
      %1970 = vrot.lane.b32.xlu0 %v1295, 113
      %v1971 = vpop.permute.xlu0 %1970
      %v1972 = vsel %vm908, %v1957, %v1965
      %v1973 = vsel %vm908, %v1959, %v1967
      %v1974 = vsel %vm908, %v1961, %v1969
      %v1975 = vsel %vm908, %v1963, %v1971
      %v1976 = vsel %vm908, %v1965, %v1957
      %v1977 = vsel %vm908, %v1967, %v1959
      %v1978 = vsel %vm908, %v1969, %v1961
      %v1979 = vsel %vm908, %v1971, %v1963
      %v1980 = vmul.f32 %v1972, %v917
      %v1981 = vmul.f32 %v1976, %v921
      %v1982 = vmul.f32 %v1973, %v917
      %v1983 = vmul.f32 %v1977, %v921
      %v1984 = vmul.f32 %v1974, %v917
      %v1985 = vmul.f32 %v1978, %v921
      %v1986 = vmul.f32 %v1975, %v917
      %v1987 = vmul.f32 %v1979, %v921
      %s1988 = scalar_lea.vmem %s4, 96
      %v1989 = vld [vmem:[%s1988] sm:$0xf]
      %v1990 = vld [vmem:[%s1988 + $0x4] sm:$0xf]
      %v1991 = vld [vmem:[%s1988 + $0x8] sm:$0xf]
      %v1992 = vld [vmem:[%s1988 + $0xc] sm:$0xf]
      %v1993 = vpack.c.bf16 %v1982, %v1980
      %v1994 = vpack.c.bf16 %v1983, %v1981
      %v1995 = vpack.c.bf16 %v1986, %v1984
      %v1996 = vpack.c.bf16 %v1987, %v1985
      %v2001 = vunpack.c.l.b16 %v1989
      %v2002 = vunpack.c.l.b16 %v1990
      %v2003 = vunpack.c.l.b16 %v1991
      %v2004 = vunpack.c.l.b16 %v1992
      %v2005 = vpack.c.b16 %v2002, %v2001
      %v2006 = vpack.c.b16 %v2004, %v2003
      %v2008 = vsel %vm1387, %v2005, 0
      %v2011 = vsel %vm1387, %v2006, 0
      %2013 = vmatprep.subr.bf16.mxu0 %v1994
      %2014 = vmatpush1.bf16.msra.mxu0 %v1993
      %2015 = vmatprep.subr.bf16.mxu0 %v1996
      %2016 = vmatpush1.bf16.msra.mxu0 %v1995
      %2017 = vmatprep.subr.bf16.mxu0 0
      %2018 = vmatpush1.bf16.msra.mxu0 0
      %2019 = vmatprep.subr.bf16.mxu0 0
      %2020 = vmatpush1.bf16.msra.mxu0 0
      %2021 = vmatprep.subr.bf16.mxu0 0
      %2022 = vmatpush1.bf16.msra.mxu0 0
      %2023 = vmatprep.subr.bf16.mxu0 0
      %2024 = vmatpush1.bf16.msra.mxu0 0
      %2025 = vmatprep.subr.bf16.mxu0 0
      %2026 = vmatpush1.bf16.msra.mxu0 0
      %2027 = vmatprep.subr.bf16.mxu0 0
      %2028 = vmatpush1.bf16.msra.mxu0 0
      %2029 = vmatprep.subr.bf16.mxu0 0
      %2030 = vmatpush1.bf16.msra.mxu0 0
      %2031 = vmatprep.subr.bf16.mxu0 0
      %2032 = vmatpush1.bf16.msra.mxu0 0
      %2033 = vmatprep.subr.bf16.mxu0 0
      %2034 = vmatpush1.bf16.msra.mxu0 0
      %2035 = vmatprep.subr.bf16.mxu0 0
      %2036 = vmatpush1.bf16.msra.mxu0 0
      %2037 = vmatprep.subr.bf16.mxu0 0
      %2038 = vmatpush1.bf16.msra.mxu0 0
      %2039 = vmatprep.subr.bf16.mxu0 0
      %2040 = vmatpush1.bf16.msra.mxu0 0
      %2041 = vmatprep.subr.bf16.mxu0 0
      %2042 = vmatpush1.bf16.msra.mxu0 0
      %2043 = vmatprep.subr.bf16.mxu0 0
      %2044 = vmatpush1.bf16.msra.mxu0 0
      %2045 = vmatprep.mubr.bf16.mxu0 0
      %2046 = vmatmul.mubr.bf16.gmra.mrb[0].mxu0 %v2008
      %v2047 = vpop.f32.mrb[0].mxu0
      %v2048 = vadd.f32 0.0, %v2047
      %v2049 = vpop.f32.mrb[0].mxu0
      %v2050 = vadd.f32 0.0, %v2049
      %v2051 = vpop.f32.mrb[0].mxu0
      %v2052 = vadd.f32 0.0, %v2051
      %v2053 = vpop.f32.mrb[0].mxu0
      %v2054 = vadd.f32 0.0, %v2053
      %2055 = vmatprep.mubr.bf16.mxu0 0
      %2056 = vmatmul.mubr.bf16.gmra.mrb[0].mxu0 %v2011
      %v2057 = vpop.f32.mrb[0].mxu0
      %v2058 = vadd.f32 0.0, %v2057
      %v2059 = vpop.f32.mrb[0].mxu0
      %v2060 = vadd.f32 0.0, %v2059
      %v2061 = vpop.f32.mrb[0].mxu0
      %v2062 = vadd.f32 0.0, %v2061
      %v2063 = vpop.f32.mrb[0].mxu0
      %v2064 = vadd.f32 0.0, %v2063
      %2065 = vdwg.mxu0
      %v2066 = vadd.f32 %v1948, %v2048
      %v2067 = vadd.f32 %v1949, %v2050
      %v2068 = vadd.f32 %v1950, %v2052
      %v2069 = vadd.f32 %v1951, %v2054
      %v2070 = vadd.f32 %v1952, %v2058
      %v2071 = vadd.f32 %v1953, %v2060
      %v2072 = vadd.f32 %v1954, %v2062
      %v2073 = vadd.f32 %v1955, %v2064
      %2074 = vrot.lane.b32.xlu0 %v1288, 112
      %v2075 = vpop.permute.xlu0 %2074
      %2076 = vrot.lane.b32.xlu0 %v1290, 112
      %v2077 = vpop.permute.xlu0 %2076
      %2078 = vrot.lane.b32.xlu0 %v1292, 112
      %v2079 = vpop.permute.xlu0 %2078
      %2080 = vrot.lane.b32.xlu0 %v1294, 112
      %v2081 = vpop.permute.xlu0 %2080
      %2082 = vrot.lane.b32.xlu0 %v1289, 112
      %v2083 = vpop.permute.xlu0 %2082
      %2084 = vrot.lane.b32.xlu0 %v1291, 112
      %v2085 = vpop.permute.xlu0 %2084
      %2086 = vrot.lane.b32.xlu0 %v1293, 112
      %v2087 = vpop.permute.xlu0 %2086
      %2088 = vrot.lane.b32.xlu0 %v1295, 112
      %v2089 = vpop.permute.xlu0 %2088
      %v2090 = vsel %vm1020, %v2075, %v2083
      %v2091 = vsel %vm1020, %v2077, %v2085
      %v2092 = vsel %vm1020, %v2079, %v2087
      %v2093 = vsel %vm1020, %v2081, %v2089
      %v2094 = vsel %vm1020, %v2083, %v2075
      %v2095 = vsel %vm1020, %v2085, %v2077
      %v2096 = vsel %vm1020, %v2087, %v2079
      %v2097 = vsel %vm1020, %v2089, %v2081
      %v2098 = vmul.f32 %v2090, %v1029
      %v2099 = vmul.f32 %v2094, %v1033
      %v2100 = vmul.f32 %v2091, %v1029
      %v2101 = vmul.f32 %v2095, %v1033
      %v2102 = vmul.f32 %v2092, %v1029
      %v2103 = vmul.f32 %v2096, %v1033
      %v2104 = vmul.f32 %v2093, %v1029
      %v2105 = vmul.f32 %v2097, %v1033
      %s2106 = scalar_lea.vmem %s4, 112
      %v2107 = vld [vmem:[%s2106] sm:$0xf]
      %v2108 = vld [vmem:[%s2106 + $0x4] sm:$0xf]
      %v2109 = vld [vmem:[%s2106 + $0x8] sm:$0xf]
      %v2110 = vld [vmem:[%s2106 + $0xc] sm:$0xf]
      %v2111 = vpack.c.bf16 %v2100, %v2098
      %v2112 = vpack.c.bf16 %v2101, %v2099
      %v2113 = vpack.c.bf16 %v2104, %v2102
      %v2114 = vpack.c.bf16 %v2105, %v2103
      %v2119 = vunpack.c.l.b16 %v2107
      %v2120 = vunpack.c.l.b16 %v2108
      %v2121 = vunpack.c.l.b16 %v2109
      %v2122 = vunpack.c.l.b16 %v2110
      %v2123 = vpack.c.b16 %v2120, %v2119
      %v2124 = vpack.c.b16 %v2122, %v2121
      %v2126 = vsel %vm1387, %v2123, 0
      %v2129 = vsel %vm1387, %v2124, 0
      %2131 = vmatprep.subr.bf16.mxu0 %v2112
      %2132 = vmatpush1.bf16.msra.mxu0 %v2111
      %2133 = vmatprep.subr.bf16.mxu0 %v2114
      %2134 = vmatpush1.bf16.msra.mxu0 %v2113
      %2135 = vmatprep.subr.bf16.mxu0 0
      %2136 = vmatpush1.bf16.msra.mxu0 0
      %2137 = vmatprep.subr.bf16.mxu0 0
      %2138 = vmatpush1.bf16.msra.mxu0 0
      %2139 = vmatprep.subr.bf16.mxu0 0
      %2140 = vmatpush1.bf16.msra.mxu0 0
      %2141 = vmatprep.subr.bf16.mxu0 0
      %2142 = vmatpush1.bf16.msra.mxu0 0
      %2143 = vmatprep.subr.bf16.mxu0 0
      %2144 = vmatpush1.bf16.msra.mxu0 0
      %2145 = vmatprep.subr.bf16.mxu0 0
      %2146 = vmatpush1.bf16.msra.mxu0 0
      %2147 = vmatprep.subr.bf16.mxu0 0
      %2148 = vmatpush1.bf16.msra.mxu0 0
      %2149 = vmatprep.subr.bf16.mxu0 0
      %2150 = vmatpush1.bf16.msra.mxu0 0
      %2151 = vmatprep.subr.bf16.mxu0 0
      %2152 = vmatpush1.bf16.msra.mxu0 0
      %2153 = vmatprep.subr.bf16.mxu0 0
      %2154 = vmatpush1.bf16.msra.mxu0 0
      %2155 = vmatprep.subr.bf16.mxu0 0
      %2156 = vmatpush1.bf16.msra.mxu0 0
      %2157 = vmatprep.subr.bf16.mxu0 0
      %2158 = vmatpush1.bf16.msra.mxu0 0
      %2159 = vmatprep.subr.bf16.mxu0 0
      %2160 = vmatpush1.bf16.msra.mxu0 0
      %2161 = vmatprep.subr.bf16.mxu0 0
      %2162 = vmatpush1.bf16.msra.mxu0 0
      %2163 = vmatprep.mubr.bf16.mxu0 0
      %2164 = vmatmul.mubr.bf16.gmra.mrb[0].mxu0 %v2126
      %v2165 = vpop.f32.mrb[0].mxu0
      %v2166 = vadd.f32 0.0, %v2165
      %v2167 = vpop.f32.mrb[0].mxu0
      %v2168 = vadd.f32 0.0, %v2167
      %v2169 = vpop.f32.mrb[0].mxu0
      %v2170 = vadd.f32 0.0, %v2169
      %v2171 = vpop.f32.mrb[0].mxu0
      %v2172 = vadd.f32 0.0, %v2171
      %2173 = vmatprep.mubr.bf16.mxu0 0
      %2174 = vmatmul.mubr.bf16.gmra.mrb[0].mxu0 %v2129
      %v2175 = vpop.f32.mrb[0].mxu0
      %v2176 = vadd.f32 0.0, %v2175
      %v2177 = vpop.f32.mrb[0].mxu0
      %v2178 = vadd.f32 0.0, %v2177
      %v2179 = vpop.f32.mrb[0].mxu0
      %v2180 = vadd.f32 0.0, %v2179
      %v2181 = vpop.f32.mrb[0].mxu0
      %v2182 = vadd.f32 0.0, %v2181
      %2183 = vdwg.mxu0
      %v2184 = vadd.f32 %v2066, %v2166
      %v2185 = vadd.f32 %v2067, %v2168
      %v2186 = vadd.f32 %v2068, %v2170
      %v2187 = vadd.f32 %v2069, %v2172
      %v2188 = vadd.f32 %v2070, %v2176
      %v2189 = vadd.f32 %v2071, %v2178
      %v2190 = vadd.f32 %v2072, %v2180
      %v2191 = vadd.f32 %v2073, %v2182
      %2192 = vrot.lane.b32.xlu0 %v1288, 111
      %v2193 = vpop.permute.xlu0 %2192
      %2194 = vrot.lane.b32.xlu0 %v1290, 111
      %v2195 = vpop.permute.xlu0 %2194
      %2196 = vrot.lane.b32.xlu0 %v1292, 111
      %v2197 = vpop.permute.xlu0 %2196
      %2198 = vrot.lane.b32.xlu0 %v1294, 111
      %v2199 = vpop.permute.xlu0 %2198
      %2200 = vrot.lane.b32.xlu0 %v1289, 111
      %v2201 = vpop.permute.xlu0 %2200
      %2202 = vrot.lane.b32.xlu0 %v1291, 111
      %v2203 = vpop.permute.xlu0 %2202
      %2204 = vrot.lane.b32.xlu0 %v1293, 111
      %v2205 = vpop.permute.xlu0 %2204
      %2206 = vrot.lane.b32.xlu0 %v1295, 111
      %v2207 = vpop.permute.xlu0 %2206
      %v2208 = vsel %vm1132, %v2193, %v2201
      %v2209 = vsel %vm1132, %v2195, %v2203
      %v2210 = vsel %vm1132, %v2197, %v2205
      %v2211 = vsel %vm1132, %v2199, %v2207
      %v2212 = vsel %vm1132, %v2201, %v2193
      %v2213 = vsel %vm1132, %v2203, %v2195
      %v2214 = vsel %vm1132, %v2205, %v2197
      %v2215 = vsel %vm1132, %v2207, %v2199
      %v2216 = vmul.f32 %v2208, %v1141
      %v2217 = vmul.f32 %v2212, %v1145
      %v2218 = vmul.f32 %v2209, %v1141
      %v2219 = vmul.f32 %v2213, %v1145
      %v2220 = vmul.f32 %v2210, %v1141
      %v2221 = vmul.f32 %v2214, %v1145
      %v2222 = vmul.f32 %v2211, %v1141
      %v2223 = vmul.f32 %v2215, %v1145
      %s2224 = scalar_lea.vmem %s4, 128
      %v2225 = vld [vmem:[%s2224] sm:$0xf]
      %v2226 = vld [vmem:[%s2224 + $0x4] sm:$0xf]
      %v2227 = vld [vmem:[%s2224 + $0x8] sm:$0xf]
      %v2228 = vld [vmem:[%s2224 + $0xc] sm:$0xf]
      %v2229 = vpack.c.bf16 %v2218, %v2216
      %v2230 = vpack.c.bf16 %v2219, %v2217
      %v2231 = vpack.c.bf16 %v2222, %v2220
      %v2232 = vpack.c.bf16 %v2223, %v2221
      %v2237 = vunpack.c.l.b16 %v2225
      %v2238 = vunpack.c.l.b16 %v2226
      %v2239 = vunpack.c.l.b16 %v2227
      %v2240 = vunpack.c.l.b16 %v2228
      %v2241 = vpack.c.b16 %v2238, %v2237
      %v2242 = vpack.c.b16 %v2240, %v2239
      %v2244 = vsel %vm1387, %v2241, 0
      %v2247 = vsel %vm1387, %v2242, 0
      %2249 = vmatprep.subr.bf16.mxu0 %v2230
      %2250 = vmatpush1.bf16.msra.mxu0 %v2229
      %2251 = vmatprep.subr.bf16.mxu0 %v2232
      %2252 = vmatpush1.bf16.msra.mxu0 %v2231
      %2253 = vmatprep.subr.bf16.mxu0 0
      %2254 = vmatpush1.bf16.msra.mxu0 0
      %2255 = vmatprep.subr.bf16.mxu0 0
      %2256 = vmatpush1.bf16.msra.mxu0 0
      %2257 = vmatprep.subr.bf16.mxu0 0
      %2258 = vmatpush1.bf16.msra.mxu0 0
      %2259 = vmatprep.subr.bf16.mxu0 0
      %2260 = vmatpush1.bf16.msra.mxu0 0
      %2261 = vmatprep.subr.bf16.mxu0 0
      %2262 = vmatpush1.bf16.msra.mxu0 0
      %2263 = vmatprep.subr.bf16.mxu0 0
      %2264 = vmatpush1.bf16.msra.mxu0 0
      %2265 = vmatprep.subr.bf16.mxu0 0
      %2266 = vmatpush1.bf16.msra.mxu0 0
      %2267 = vmatprep.subr.bf16.mxu0 0
      %2268 = vmatpush1.bf16.msra.mxu0 0
      %2269 = vmatprep.subr.bf16.mxu0 0
      %2270 = vmatpush1.bf16.msra.mxu0 0
      %2271 = vmatprep.subr.bf16.mxu0 0
      %2272 = vmatpush1.bf16.msra.mxu0 0
      %2273 = vmatprep.subr.bf16.mxu0 0
      %2274 = vmatpush1.bf16.msra.mxu0 0
      %2275 = vmatprep.subr.bf16.mxu0 0
      %2276 = vmatpush1.bf16.msra.mxu0 0
      %2277 = vmatprep.subr.bf16.mxu0 0
      %2278 = vmatpush1.bf16.msra.mxu0 0
      %2279 = vmatprep.subr.bf16.mxu0 0
      %2280 = vmatpush1.bf16.msra.mxu0 0
      %2281 = vmatprep.mubr.bf16.mxu0 0
      %2282 = vmatmul.mubr.bf16.gmra.mrb[0].mxu0 %v2244
      %v2283 = vpop.f32.mrb[0].mxu0
      %v2284 = vadd.f32 0.0, %v2283
      %v2285 = vpop.f32.mrb[0].mxu0
      %v2286 = vadd.f32 0.0, %v2285
      %v2287 = vpop.f32.mrb[0].mxu0
      %v2288 = vadd.f32 0.0, %v2287
      %v2289 = vpop.f32.mrb[0].mxu0
      %v2290 = vadd.f32 0.0, %v2289
      %2291 = vmatprep.mubr.bf16.mxu0 0
      %2292 = vmatmul.mubr.bf16.gmra.mrb[0].mxu0 %v2247
      %v2293 = vpop.f32.mrb[0].mxu0
      %v2294 = vadd.f32 0.0, %v2293
      %v2295 = vpop.f32.mrb[0].mxu0
      %v2296 = vadd.f32 0.0, %v2295
      %v2297 = vpop.f32.mrb[0].mxu0
      %v2298 = vadd.f32 0.0, %v2297
      %v2299 = vpop.f32.mrb[0].mxu0
      %v2300 = vadd.f32 0.0, %v2299
      %2301 = vdwg.mxu0
      %v2302 = vadd.f32 %v2184, %v2284
      %v2303 = vadd.f32 %v2185, %v2286
      %v2304 = vadd.f32 %v2186, %v2288
      %v2305 = vadd.f32 %v2187, %v2290
      %v2306 = vadd.f32 %v2188, %v2294
      %v2307 = vadd.f32 %v2189, %v2296
      %v2308 = vadd.f32 %v2190, %v2298
      %v2309 = vadd.f32 %v2191, %v2300
      %v2310 = vld [vmem:[%s5] sm:$0xff]
      %v2311 = vld [vmem:[%s5 + $0x8] sm:$0xff]
      %v2312 = vld [vmem:[%s5 + $0x10] sm:$0xff]
      %v2313 = vld [vmem:[%s5 + $0x18] sm:$0xff]
      %2315 = vset.pattern.permute.xlu0 0
      %2316 = vperm.xlu0 %2315, %v2310
      %v2317 = vpop.permute.xlu0 %2316
      %2320 = vset.pattern.permute.xlu0 0
      %2321 = vperm.xlu0 %2320, %v2311
      %v2322 = vpop.permute.xlu0 %2321
      %2325 = vset.pattern.permute.xlu0 0
      %2326 = vperm.xlu0 %2325, %v2312
      %v2327 = vpop.permute.xlu0 %2326
      %2330 = vset.pattern.permute.xlu0 0
      %2331 = vperm.xlu0 %2330, %v2313
      %v2332 = vpop.permute.xlu0 %2331
      %v2334 = vadd.f32 %v2302, %v2317
      %v2335 = vadd.f32 %v2303, %v2317
      %v2336 = vadd.f32 %v2304, %v2322
      %v2337 = vadd.f32 %v2305, %v2322
      %v2338 = vadd.f32 %v2306, %v2327
      %v2339 = vadd.f32 %v2307, %v2327
      %v2340 = vadd.f32 %v2308, %v2332
      %v2341 = vadd.f32 %v2309, %v2332
      %vm2342 = vcmp.ge.f32.partialorder %v2334, 0.0
      %vm2343 = vcmp.ge.f32.partialorder %v2335, 0.0
      %vm2344 = vcmp.ge.f32.partialorder %v2336, 0.0
      %vm2345 = vcmp.ge.f32.partialorder %v2337, 0.0
      %vm2346 = vcmp.ge.f32.partialorder %v2338, 0.0
      %vm2347 = vcmp.ge.f32.partialorder %v2339, 0.0
      %vm2348 = vcmp.ge.f32.partialorder %v2340, 0.0
      %vm2349 = vcmp.ge.f32.partialorder %v2341, 0.0
      %v2350 = vmul.f32 %v2334, 0.05
      %v2351 = vmul.f32 %v2335, 0.05
      %v2352 = vmul.f32 %v2336, 0.05
      %v2353 = vmul.f32 %v2337, 0.05
      %v2354 = vmul.f32 %v2338, 0.05
      %v2355 = vmul.f32 %v2339, 0.05
      %v2356 = vmul.f32 %v2340, 0.05
      %v2357 = vmul.f32 %v2341, 0.05
      %v2358 = vsel %vm2342, %v2334, %v2350
      %v2359 = vsel %vm2343, %v2335, %v2351
      %v2360 = vsel %vm2344, %v2336, %v2352
      %v2361 = vsel %vm2345, %v2337, %v2353
      %v2362 = vsel %vm2346, %v2338, %v2354
      %v2363 = vsel %vm2347, %v2339, %v2355
      %v2364 = vsel %vm2348, %v2340, %v2356
      %v2365 = vsel %vm2349, %v2341, %v2357
      %2366 = vst [vmem:[%s251] sm:$0xff] %v2358
      %2367 = vst [vmem:[%s251 + $0x8] sm:$0xff] %v2359
      %2368 = vst [vmem:[%s251 + $0x10] sm:$0xff] %v2360
      %2369 = vst [vmem:[%s251 + $0x18] sm:$0xff] %v2361
      %2370 = vst [vmem:[%s251 + $0x20] sm:$0xff] %v2362
      %2371 = vst [vmem:[%s251 + $0x28] sm:$0xff] %v2363
      %2372 = vst [vmem:[%s251 + $0x30] sm:$0xff] %v2364
      %2373 = vst [vmem:[%s251 + $0x38] sm:$0xff] %v2365
      %p2374 = scmp.lt.s32.totalorder %s17, 1
      %s2375 = scalar_select %p2374, %s17, 1
      %s2376 = smul.addr %s2375, 8
      %s2377 = smul.addr %s2376, 8
      %s2378 = scalar_lea.vmem %s6, %s2377
      // Predicated region
      $region45: #{fblock_forward.1} parent=43 // pred_check
        %p2379 = pneg %p166
      $region46: #{fblock_forward.1} parent=43 // pred_check_branch
        %2381 = sbr.rel (%p2379) target = $region48
      $region47: #{fblock_forward.1} parent=43 // pred_region
        _
      $region48: #{fblock_forward.1} parent=43 // pred_fallthru
        _
    $region44: #{fblock_forward.1} parent=5 // pred_fallthru
      _
    %p2382 = scmp.le.s32.totalorder 2, %s12
    // Predicated region
    $region49: #{fblock_forward.1} parent=5 // pred_check
      %p2383 = pneg %p2382
    $region50: #{fblock_forward.1} parent=5 // pred_check_branch
      %2385 = sbr.rel (%p2383) target = $region52
    $region51: #{fblock_forward.1} parent=5 // pred_region
      %s2386 = ssub.s32 %s12, 2
      // Predicated region
      $region53: #{fblock_forward.1} parent=51 // pred_check
        %p2387 = pneg %p172
      $region54: #{fblock_forward.1} parent=51 // pred_check_branch
        %2389 = sbr.rel (%p2387) target = $region56
      $region55: #{fblock_forward.1} parent=51 // pred_region
        %p2390 = scmp.lt.s32.totalorder %s18, 1
        %s2391 = scalar_select %p2390, %s18, 1
        %s2392 = smul.addr %s2391, 8
        %s2393 = smul.addr %s2392, 8
        %s2394 = scalar_lea.vmem %s6, %s2393
      $region56: #{fblock_forward.1} parent=51 // pred_fallthru
        _
    $region52: #{fblock_forward.1} parent=5 // pred_fallthru
      _
  $region6: #{fblock_forward.1} parent=0 // loop_footer
    %s16 = sadd.s32 1, %s12
  $region7: #{fblock_forward.1} parent=0 // loop_footer_branch
    %11 = sbr.rel target = $region3
  $region8: #{fblock_forward.1} parent=0 // loop_exit
    _

</llo_original>
